<compile_context>
chip_gen: v7x
topology: tpu7x:2x2x1
jax: 0.10.0
libtpu: 0.0.40
codegen_flags: <defaults>
</compile_context>

<pallas_src>
import jax
import jax.numpy as jnp
from jax.experimental import pallas as pl
from jax.experimental.pallas import tpu as pltpu


def _round_up(n, m):
    return (n + m - 1) // m * m


_TARGET_ROWS_PER_STEP = 2048   # ~85%+ HBM-roofline tile class; amortizes ~0.35us/step


def _pick_batch_tile(B, Sp, Din, max_w, P, budget_bytes):
    """Sequences per grid step, derived from a VMEM byte budget."""
    # Live per-sequence bytes in one step: 2 pipelined bf16 x buffers plus the f32
    # conv intermediates z ([Sp, max_w*P]) and acc ([Sp, P]).
    per_seq = Sp * (2 * 2 * Din + (max_w + 2) * P * 4)
    bt = max(1, budget_bytes // max(per_seq, 1))
    bt = min(bt, max(1, _TARGET_ROWS_PER_STEP // Sp))
    if B > 8:
        # keep >= 2 grid steps whenever B permits so both v7x TensorCores get work
        bt = min(bt, _round_up(-(-B // 2), 8))
    bt = max(8, bt // 8 * 8)             # 8-sublane-aligned output tiles (full-lane stores)
    bt = min(bt, _round_up(B, 8))        # don't blow a tiny batch up to a huge tile
    return int(bt)


def _shift_up(x, s):
    """jnp.roll(x, -s, axis=0) via concatenation (fallback when pltpu.roll is unavailable)."""
    return jnp.concatenate([x[s:, :], x[:s, :]], axis=0) if s else x


def make_cnn_classifier_kernel(*, seq_pad, max_w, feat_pad, out_dim, use_xlu_roll=True):
    Sp, P = seq_pad, feat_pad

    def shift_up(x, s, rows):
        if s == 0:
            return x
        if use_xlu_roll:
            # XLU sublane rotation == jnp.roll(x, -s, axis=0); wrapped rows are masked below.
            return pltpu.roll(x, shift=rows - s, axis=0)
        return _shift_up(x, s)

    def kernel(x_ref, wf_ref, bf_ref, mask_ref, wl_ref, bl_ref, out_ref):
        rows = x_ref.shape[0]                                    # bt * Sp

        # Fused (itoh o conv): one lane-dense MXU pass over every tap of every window.
        #   [rows, Din] bf16 @ [Din, max_w*P] bf16 -> f32
        z = jnp.dot(x_ref[...], wf_ref[...], preferred_element_type=jnp.float32)

        # Tap s contributes its 128-lane-aligned slab shifted up by s sequence steps.
        acc = z[:, 0:P]
        for s in range(1, max_w):
            acc = acc + shift_up(z[:, s * P:(s + 1) * P], s, rows)
        acc = jnp.maximum(acc + bf_ref[...], 0.0)                # folded bias + ReLU (f32)

        # Zero conv positions that run off the real sequence (also kills the roll-wrap,
        # cross-sequence and padded rows).  ReLU output >= 0 so 0 is neutral for the max.
        acc3 = acc.reshape(rows // Sp, Sp, P) * mask_ref[...]    # mask: {0,1} f32 [Sp,P]
        pooled = jnp.max(acc3, axis=1)                           # [bt, P]

        # Final Linear + LogSoftmax on lane-padded logits (full-lane store).
        logits = jnp.dot(pooled.astype(jnp.bfloat16), wl_ref[...],
                         preferred_element_type=jnp.float32) + bl_ref[...]
        lane = jax.lax.broadcasted_iota(jnp.int32, logits.shape, 1)
        logits = jnp.where(lane < out_dim, logits, -1e30)        # padded lanes out of softmax
        m = jnp.max(logits, axis=1, keepdims=True)
        lse = jnp.log(jnp.sum(jnp.exp(logits - m), axis=1, keepdims=True)) + m
        out_ref[...] = logits - lse

    return kernel


def pack_cnn_params(wi, bi, conv_params, wl, bl, window_sizes):
    """Fold the itoh Linear into the conv weights and pack lane-padded bf16 slabs."""
    Din, H = wi.shape
    F = conv_params[0][0].shape[-1]
    n_w = len(window_sizes)
    max_w = max(window_sizes)
    out_dim = wl.shape[1]

    P = _round_up(n_w * F, 128)      # lane-padded conv-feature width
    PO = _round_up(out_dim, 128)     # lane-padded logits width

    # conv_t[c] = sum_s emb[t+s] @ wc_s[:, c] + bc[c]
    #           = sum_s x[t+s] @ (wi @ wc_s)[:, c]  +  (bc[c] + sum_s bi @ wc_s[:, c])
    wf = jnp.zeros((max_w, Din, P), jnp.float32)     # shift slab s, column k*F + f
    bf = jnp.zeros((1, P), jnp.float32)
    wcol = jnp.ones((P,), jnp.int32)                 # window size per column (1 for pad cols)
    for k, ((wck, bck), w) in enumerate(zip(conv_params, window_sizes)):
        assert wck.shape == (w, H, F) and bck.shape[-1] == F
        c0 = k * F
        for s in range(w):
            wf = wf.at[s, :, c0:c0 + F].set(wi @ wck[s])
            bf = bf.at[:, c0:c0 + F].add(bi.reshape(1, H) @ wck[s])
        bf = bf.at[:, c0:c0 + F].add(bck.reshape(1, F))
        wcol = wcol.at[c0:c0 + F].set(w)
    # The max-pool masking relies on padded columns being exactly zero.
    assert bool(jnp.all(bf[:, n_w * F:] == 0.0)), "padded conv-bias lanes must be exactly 0"

    wf_p = wf.transpose(1, 0, 2).reshape(Din, max_w * P).astype(jnp.bfloat16)
    wl_p = jnp.zeros((P, PO), jnp.float32).at[:n_w * F, :out_dim].set(wl).astype(jnp.bfloat16)
    bl_p = jnp.zeros((1, PO), jnp.float32).at[:, :out_dim].set(bl)

    return (wf_p, bf, wcol, wl_p, bl_p), (P, PO, max_w, out_dim)


def cnn_classifier_forward(x, wi, bi, conv_params, wl, bl, window_sizes):
    B, S, Din = x.shape
    assert S >= max(window_sizes), "sequence must be at least as long as the largest window"

    packed, (P, PO, max_w, out_dim) = pack_cnn_params(wi, bi, conv_params, wl, bl, window_sizes)
    wf_p, bf_p, wcol, wl_p, bl_p = packed

    Sp = _round_up(S, 8)             # sublane-aligned sequence length (padded rows masked)

    # mask[t, c] = 1 iff a window of size w_c starting at position t fits inside the
    # real sequence; precomputed so the kernel has no iota / modulo / compare chain.
    t = jnp.arange(Sp, dtype=jnp.int32)[:, None]
    mask = (t + wcol[None, :] <= S).astype(jnp.float32)          # [Sp, P]

    # --- VMEM-budget-driven batch tiling with ragged tail -------------------------
    try:
        vmem_cap = int(pltpu.get_tpu_info().vmem_capacity_bytes)
    except Exception:
        vmem_cap = 64 * 1024 * 1024                              # v7x per-TC VMEM (smallest)
    vmem_limit = min(vmem_cap * 3 // 4, 96 * 1024 * 1024)        # ~48 MiB v7x, ~96 MiB v5e/v6e
    bt = _pick_batch_tile(B, Sp, Din, max_w, P, vmem_limit // 3)
    grid_b = -(-B // bt)
    Bpad = grid_b * bt

    # bf16 input halves the dominant HBM traffic; padded rows/sequences are zero.
    xp = jnp.zeros((Bpad, Sp, Din), jnp.bfloat16)
    xp = xp.at[:B, :S, :].set(x.astype(jnp.bfloat16))
    x2d = xp.reshape(Bpad * Sp, Din)

    def _build(single_buffer_consts, use_xlu_roll):
        kernel = make_cnn_classifier_kernel(seq_pad=Sp, max_w=max_w, feat_pad=P,
                                            out_dim=out_dim, use_xlu_roll=use_xlu_roll)
        const_kw = {"pipeline_mode": pl.Buffered(1)} if single_buffer_consts else {}

        def cspec(shape):
            # Grid-invariant operands: single-buffered (index_map is constant, so they
            # are fetched once; no need to reserve 2x their VMEM).
            return pl.BlockSpec(shape, lambda b: (0,) * len(shape), **const_kw)

        return pl.pallas_call(
            kernel,
            out_shape=jax.ShapeDtypeStruct((Bpad, PO), jnp.float32),
            grid_spec=pltpu.PrefetchScalarGridSpec(
                num_scalar_prefetch=0,
                grid=(grid_b,),
                in_specs=[
                    pl.BlockSpec((bt * Sp, Din), lambda b: (b, 0)),  # x tile (bf16)
                    cspec((Din, max_w * P)),                         # fused itoh∘conv W (bf16)
                    cspec((1, P)),                                   # fused conv bias (f32)
                    cspec((Sp, P)),                                  # validity mask (f32 {0,1})
                    cspec((P, PO)),                                  # final linear W (bf16)
                    cspec((1, PO)),                                  # final linear b (f32)
                ],
                out_specs=pl.BlockSpec((bt, PO), lambda b: (b, 0)),
            ),
            compiler_params=pltpu.CompilerParams(
                dimension_semantics=("parallel",),
                vmem_limit_bytes=int(vmem_limit),
            ),
        )

    try:
        out_padded = _build(True, True)(x2d, wf_p, bf_p, mask, wl_p, bl_p)
    except Exception:
        # Conservative fallback for older jax (no BlockSpec.pipeline_mode / sublane roll):
        # default double-buffering + concat-based shift. Same math, previously validated.
        out_padded = _build(False, False)(x2d, wf_p, bf_p, mask, wl_p, bl_p)

    return out_padded[:B, :out_dim]


def ref_forward(x, wi, bi, conv_params, wl, bl, window_sizes):
    """Pure-JAX f32 reference for correctness checking."""
    x = x.astype(jnp.float32)
    emb = x @ wi + bi
    feats = []
    for (wc, bc), w in zip(conv_params, window_sizes):
        T = emb.shape[1] - w + 1
        acc = jnp.zeros((x.shape[0], T, wc.shape[-1]), jnp.float32)
        for i in range(w):
            acc = acc + emb[:, i:i + T, :] @ wc[i]
        acc = jax.nn.relu(acc + bc)
        feats.append(jnp.max(acc, axis=1))
    f = jnp.concatenate(feats, axis=1)
    logits = f @ wl + bl
    return jax.nn.log_softmax(logits, axis=1)


if __name__ == "__main__":
    # Small shapes consistent with the module's forward.
    B, S = 2, 16
    input_dim, hidden_dim, output_dim = 32, 32, 4
    num_filters = 8
    window_sizes = [1, 2, 3]

    key = jax.random.PRNGKey(0)
    ks = jax.random.split(key, 4 + 2 * len(window_sizes))

    # Deterministic synthetic parameters (math-ready layout: [in, out] etc.).
    wi = 0.1 * jax.random.normal(ks[0], (input_dim, hidden_dim), jnp.float32)
    bi = 0.1 * jax.random.normal(ks[1], (1, hidden_dim), jnp.float32)
    conv_params = []
    for j, w in enumerate(window_sizes):
        wc = 0.1 * jax.random.normal(ks[2 + 2 * j], (w, hidden_dim, num_filters), jnp.float32)
        bc = 0.1 * jax.random.normal(ks[3 + 2 * j], (1, num_filters), jnp.float32)
        conv_params.append((wc, bc))
    wl = 0.1 * jax.random.normal(ks[2 + 2 * len(window_sizes)],
                                 (len(window_sizes) * num_filters, output_dim), jnp.float32)
    bl = 0.1 * jax.random.normal(ks[3 + 2 * len(window_sizes)], (1, output_dim), jnp.float32)

    # The module just casts the input to float, so any floats are a valid input.
    x = jax.random.uniform(key, (B, S, input_dim), jnp.float32)

    out = cnn_classifier_forward(x, wi, bi, conv_params, wl, bl, window_sizes)
    out = jax.block_until_ready(out)

    ref = ref_forward(x, wi, bi, conv_params, wl, bl, window_sizes)
    assert out.shape == (B, output_dim)
    # bf16 operands / folded bf16 weights (f32 accumulation) vs. the pure-f32 reference.
    assert jnp.allclose(out, ref, atol=2e-2, rtol=2e-2), (out, ref)
    # log-softmax rows must exponentiate-sum to 1 (exact property of the kernel's lse).
    assert jnp.allclose(jnp.sum(jnp.exp(out), axis=1), 1.0, atol=1e-4)

    print("KERNEL_OK")
</pallas_src>

<mosaic_0001>
module attributes {stable_mosaic.version = 11 : i64} {
  func.func @kernel(%arg0: i32, %arg1: memref<128x32xbf16, #tpu.memory_space<vmem>>, %arg2: memref<32x384xbf16, #tpu.memory_space<vmem>>, %arg3: memref<1x128xf32, #tpu.memory_space<vmem>>, %arg4: memref<16x128xf32, #tpu.memory_space<vmem>>, %arg5: memref<128x128xbf16, #tpu.memory_space<vmem>>, %arg6: memref<1x128xf32, #tpu.memory_space<vmem>>, %arg7: memref<8x128xf32, #tpu.memory_space<vmem>>) attributes {dimension_semantics = [#tpu.dimension_semantics<parallel>], iteration_bounds = array<i64: 1>, scalar_prefetch = 0 : i64, scratch_operands = 0 : i64, tpu.core_type = #tpu.core_type<tc>, window_params = [{transform_indices = @transform_0, window_bounds = array<i64: 128, 32>}, {pipeline_mode = #tpu.pipeline_mode<synchronous>, transform_indices = @transform_1, window_bounds = array<i64: 32, 384>}, {pipeline_mode = #tpu.pipeline_mode<synchronous>, transform_indices = @transform_2, window_bounds = array<i64: 1, 128>}, {pipeline_mode = #tpu.pipeline_mode<synchronous>, transform_indices = @transform_3, window_bounds = array<i64: 16, 128>}, {pipeline_mode = #tpu.pipeline_mode<synchronous>, transform_indices = @transform_4, window_bounds = array<i64: 128, 128>}, {pipeline_mode = #tpu.pipeline_mode<synchronous>, transform_indices = @transform_5, window_bounds = array<i64: 1, 128>}, {transform_indices = @transform_6, window_bounds = array<i64: 8, 128>}]} {
    %c0 = arith.constant 0 : index
    %c0_0 = arith.constant 0 : index
    %0 = vector.load %arg1[%c0, %c0_0] : memref<128x32xbf16, #tpu.memory_space<vmem>>, vector<128x32xbf16>
    %c0_1 = arith.constant 0 : index
    %c0_2 = arith.constant 0 : index
    %1 = vector.load %arg2[%c0_1, %c0_2] : memref<32x384xbf16, #tpu.memory_space<vmem>>, vector<32x384xbf16>
    %cst = arith.constant dense<0.000000e+00> : vector<128x384xf32>
    %2 = tpu.matmul %0, %1, %cst {dimension_numbers = #tpu.dot_dimension_numbers<[1], [0], [0], [1], [0, 0, 1, 1], [], []>} : vector<128x32xbf16>, vector<32x384xbf16>, vector<128x384xf32> -> vector<128x384xf32>
    %3 = vector.extract_strided_slice %2 {offsets = [0, 0], sizes = [128, 128], strides = [1, 1]} : vector<128x384xf32> to vector<128x128xf32>
    %4 = vector.extract_strided_slice %2 {offsets = [0, 128], sizes = [128, 128], strides = [1, 1]} : vector<128x384xf32> to vector<128x128xf32>
    %c127_i32 = arith.constant 127 : i32
    %5 = tpu.dynamic_rotate %4 by %c127_i32 dim 0 : vector<128x128xf32>, i32 -> vector<128x128xf32>
    %6 = arith.addf %3, %5 : vector<128x128xf32>
    %7 = vector.extract_strided_slice %2 {offsets = [0, 256], sizes = [128, 128], strides = [1, 1]} : vector<128x384xf32> to vector<128x128xf32>
    %c126_i32 = arith.constant 126 : i32
    %8 = tpu.dynamic_rotate %7 by %c126_i32 dim 0 : vector<128x128xf32>, i32 -> vector<128x128xf32>
    %9 = arith.addf %6, %8 : vector<128x128xf32>
    %c0_3 = arith.constant 0 : index
    %c0_4 = arith.constant 0 : index
    %10 = vector.load %arg3[%c0_3, %c0_4] : memref<1x128xf32, #tpu.memory_space<vmem>>, vector<1x128xf32>
    %11 = vector.broadcast %10 : vector<1x128xf32> to vector<128x128xf32>
    %12 = arith.addf %9, %11 : vector<128x128xf32>
    %cst_5 = arith.constant 0.000000e+00 : f32
    %13 = vector.broadcast %cst_5 : f32 to vector<128x128xf32>
    %14 = arith.maximumf %12, %13 : vector<128x128xf32>
    %15 = vector.shape_cast %14 : vector<128x128xf32> to vector<8x16x128xf32>
    %c0_6 = arith.constant 0 : index
    %c0_7 = arith.constant 0 : index
    %16 = vector.load %arg4[%c0_6, %c0_7] : memref<16x128xf32, #tpu.memory_space<vmem>>, vector<16x128xf32>
    %17 = vector.shape_cast %16 : vector<16x128xf32> to vector<1x16x128xf32>
    %18 = vector.broadcast %17 : vector<1x16x128xf32> to vector<8x16x128xf32>
    %19 = arith.mulf %15, %18 : vector<8x16x128xf32>
    %cst_8 = arith.constant dense<0xFF800000> : vector<8x128xf32>
    %20 = vector.multi_reduction <maximumf>, %19, %cst_8 [1] : vector<8x16x128xf32> to vector<8x128xf32>
    %21 = arith.truncf %20 : vector<8x128xf32> to vector<8x128xbf16>
    %c0_9 = arith.constant 0 : index
    %c0_10 = arith.constant 0 : index
    %22 = vector.load %arg5[%c0_9, %c0_10] : memref<128x128xbf16, #tpu.memory_space<vmem>>, vector<128x128xbf16>
    %cst_11 = arith.constant dense<0.000000e+00> : vector<8x128xf32>
    %23 = tpu.matmul %21, %22, %cst_11 {dimension_numbers = #tpu.dot_dimension_numbers<[1], [0], [0], [1], [0, 0, 1, 1], [], []>} : vector<8x128xbf16>, vector<128x128xbf16>, vector<8x128xf32> -> vector<8x128xf32>
    %c0_12 = arith.constant 0 : index
    %c0_13 = arith.constant 0 : index
    %24 = vector.load %arg6[%c0_12, %c0_13] : memref<1x128xf32, #tpu.memory_space<vmem>>, vector<1x128xf32>
    %25 = vector.broadcast %24 : vector<1x128xf32> to vector<8x128xf32>
    %26 = arith.addf %23, %25 : vector<8x128xf32>
    %27 = tpu.iota {dimensions = array<i32: 1>} : vector<8x128xi32>
    %c4_i32 = arith.constant 4 : i32
    %28 = vector.broadcast %c4_i32 : i32 to vector<8x128xi32>
    %29 = arith.cmpi slt, %27, %28 : vector<8x128xi32>
    %cst_14 = arith.constant -1.000000e+30 : f32
    %30 = vector.broadcast %cst_14 : f32 to vector<8x128xf32>
    %31 = arith.select %29, %26, %30 : vector<8x128xi1>, vector<8x128xf32>
    %cst_15 = arith.constant dense<0xFF800000> : vector<8xf32>
    %32 = vector.multi_reduction <maximumf>, %31, %cst_15 [1] : vector<8x128xf32> to vector<8xf32>
    %33 = vector.shape_cast %32 : vector<8xf32> to vector<8x1xf32>
    %34 = vector.broadcast %33 : vector<8x1xf32> to vector<8x128xf32>
    %35 = arith.subf %31, %34 : vector<8x128xf32>
    %36 = math.exp %35 : vector<8x128xf32>
    %cst_16 = arith.constant dense<0.000000e+00> : vector<8xf32>
    %37 = vector.multi_reduction <add>, %36, %cst_16 [1] : vector<8x128xf32> to vector<8xf32>
    %38 = vector.shape_cast %37 : vector<8xf32> to vector<8x1xf32>
    %39 = math.log %38 : vector<8x1xf32>
    %40 = arith.addf %39, %33 : vector<8x1xf32>
    %41 = vector.broadcast %40 : vector<8x1xf32> to vector<8x128xf32>
    %42 = arith.subf %31, %41 : vector<8x128xf32>
    %c0_17 = arith.constant 0 : index
    %c0_18 = arith.constant 0 : index
    %43 = vector.load %arg7[%c0_17, %c0_18] : memref<8x128xf32, #tpu.memory_space<vmem>>, vector<8x128xf32>
    tpu.vector_store %arg7[%c0_17, %c0_18], %42 {strides = array<i32>} : memref<8x128xf32, #tpu.memory_space<vmem>>, vector<8x128xf32>,
    return
  }
  func.func @transform_0(%arg0: i32) -> (i32, i32) {
    %c0_i32 = arith.constant 0 : i32
    %c0_i32_0 = arith.constant 0 : i32
    return %arg0, %c0_i32 : i32, i32
  }
  func.func @transform_1(%arg0: i32) -> (i32, i32) {
    %c0_i32 = arith.constant 0 : i32
    %c0_i32_0 = arith.constant 0 : i32
    %c0_i32_1 = arith.constant 0 : i32
    return %c0_i32, %c0_i32_0 : i32, i32
  }
  func.func @transform_2(%arg0: i32) -> (i32, i32) {
    %c0_i32 = arith.constant 0 : i32
    %c0_i32_0 = arith.constant 0 : i32
    %c0_i32_1 = arith.constant 0 : i32
    return %c0_i32, %c0_i32_0 : i32, i32
  }
  func.func @transform_3(%arg0: i32) -> (i32, i32) {
    %c0_i32 = arith.constant 0 : i32
    %c0_i32_0 = arith.constant 0 : i32
    %c0_i32_1 = arith.constant 0 : i32
    return %c0_i32, %c0_i32_0 : i32, i32
  }
  func.func @transform_4(%arg0: i32) -> (i32, i32) {
    %c0_i32 = arith.constant 0 : i32
    %c0_i32_0 = arith.constant 0 : i32
    %c0_i32_1 = arith.constant 0 : i32
    return %c0_i32, %c0_i32_0 : i32, i32
  }
  func.func @transform_5(%arg0: i32) -> (i32, i32) {
    %c0_i32 = arith.constant 0 : i32
    %c0_i32_0 = arith.constant 0 : i32
    %c0_i32_1 = arith.constant 0 : i32
    return %c0_i32, %c0_i32_0 : i32, i32
  }
  func.func @transform_6(%arg0: i32) -> (i32, i32) {
    %c0_i32 = arith.constant 0 : i32
    %c0_i32_0 = arith.constant 0 : i32
    return %arg0, %c0_i32 : i32, i32
  }
}

module attributes {stable_mosaic.version = 11 : i64} {
  func.func @kernel(%arg0: i32, %arg1: memref<128x32xbf16, #tpu.memory_space<vmem>>, %arg2: memref<32x384xbf16, #tpu.memory_space<vmem>>, %arg3: memref<1x128xf32, #tpu.memory_space<vmem>>, %arg4: memref<16x128xf32, #tpu.memory_space<vmem>>, %arg5: memref<128x128xbf16, #tpu.memory_space<vmem>>, %arg6: memref<1x128xf32, #tpu.memory_space<vmem>>, %arg7: memref<8x128xf32, #tpu.memory_space<vmem>>) attributes {dimension_semantics = [#tpu.dimension_semantics<parallel>], iteration_bounds = array<i64: 1>, scalar_prefetch = 0 : i64, scratch_operands = 0 : i64, tpu.core_type = #tpu.core_type<tc>, window_params = [{transform_indices = @transform_0, window_bounds = array<i64: 128, 32>}, {pipeline_mode = #tpu.pipeline_mode<synchronous>, transform_indices = @transform_1, window_bounds = array<i64: 32, 384>}, {pipeline_mode = #tpu.pipeline_mode<synchronous>, transform_indices = @transform_2, window_bounds = array<i64: 1, 128>}, {pipeline_mode = #tpu.pipeline_mode<synchronous>, transform_indices = @transform_3, window_bounds = array<i64: 16, 128>}, {pipeline_mode = #tpu.pipeline_mode<synchronous>, transform_indices = @transform_4, window_bounds = array<i64: 128, 128>}, {pipeline_mode = #tpu.pipeline_mode<synchronous>, transform_indices = @transform_5, window_bounds = array<i64: 1, 128>}, {transform_indices = @transform_6, window_bounds = array<i64: 8, 128>}]} {
    %c0 = arith.constant 0 : index
    %c0_0 = arith.constant 0 : index
    %0 = vector.load %arg1[%c0, %c0_0] : memref<128x32xbf16, #tpu.memory_space<vmem>>, vector<128x32xbf16>
    %c0_1 = arith.constant 0 : index
    %c0_2 = arith.constant 0 : index
    %1 = vector.load %arg2[%c0_1, %c0_2] : memref<32x384xbf16, #tpu.memory_space<vmem>>, vector<32x384xbf16>
    %cst = arith.constant dense<0.000000e+00> : vector<128x384xf32>
    %2 = tpu.matmul %0, %1, %cst {dimension_numbers = #tpu.dot_dimension_numbers<[1], [0], [0], [1], [0, 0, 1, 1], [], []>} : vector<128x32xbf16>, vector<32x384xbf16>, vector<128x384xf32> -> vector<128x384xf32>
    %3 = vector.extract_strided_slice %2 {offsets = [0, 0], sizes = [128, 128], strides = [1, 1]} : vector<128x384xf32> to vector<128x128xf32>
    %4 = vector.extract_strided_slice %2 {offsets = [0, 128], sizes = [128, 128], strides = [1, 1]} : vector<128x384xf32> to vector<128x128xf32>
    %5 = vector.extract_strided_slice %4 {offsets = [1, 0], sizes = [127, 128], strides = [1, 1]} : vector<128x128xf32> to vector<127x128xf32>
    %6 = vector.extract_strided_slice %4 {offsets = [0, 0], sizes = [1, 128], strides = [1, 1]} : vector<128x128xf32> to vector<1x128xf32>
    %7 = tpu.concatenate %5, %6 in 0 : vector<127x128xf32>, vector<1x128xf32> -> vector<128x128xf32>
    %8 = arith.addf %3, %7 : vector<128x128xf32>
    %9 = vector.extract_strided_slice %2 {offsets = [0, 256], sizes = [128, 128], strides = [1, 1]} : vector<128x384xf32> to vector<128x128xf32>
    %10 = vector.extract_strided_slice %9 {offsets = [2, 0], sizes = [126, 128], strides = [1, 1]} : vector<128x128xf32> to vector<126x128xf32>
    %11 = vector.extract_strided_slice %9 {offsets = [0, 0], sizes = [2, 128], strides = [1, 1]} : vector<128x128xf32> to vector<2x128xf32>
    %12 = tpu.concatenate %10, %11 in 0 : vector<126x128xf32>, vector<2x128xf32> -> vector<128x128xf32>
    %13 = arith.addf %8, %12 : vector<128x128xf32>
    %c0_3 = arith.constant 0 : index
    %c0_4 = arith.constant 0 : index
    %14 = vector.load %arg3[%c0_3, %c0_4] : memref<1x128xf32, #tpu.memory_space<vmem>>, vector<1x128xf32>
    %15 = vector.broadcast %14 : vector<1x128xf32> to vector<128x128xf32>
    %16 = arith.addf %13, %15 : vector<128x128xf32>
    %cst_5 = arith.constant 0.000000e+00 : f32
    %17 = vector.broadcast %cst_5 : f32 to vector<128x128xf32>
    %18 = arith.maximumf %16, %17 : vector<128x128xf32>
    %19 = vector.shape_cast %18 : vector<128x128xf32> to vector<8x16x128xf32>
    %c0_6 = arith.constant 0 : index
    %c0_7 = arith.constant 0 : index
    %20 = vector.load %arg4[%c0_6, %c0_7] : memref<16x128xf32, #tpu.memory_space<vmem>>, vector<16x128xf32>
    %21 = vector.shape_cast %20 : vector<16x128xf32> to vector<1x16x128xf32>
    %22 = vector.broadcast %21 : vector<1x16x128xf32> to vector<8x16x128xf32>
    %23 = arith.mulf %19, %22 : vector<8x16x128xf32>
    %cst_8 = arith.constant dense<0xFF800000> : vector<8x128xf32>
    %24 = vector.multi_reduction <maximumf>, %23, %cst_8 [1] : vector<8x16x128xf32> to vector<8x128xf32>
    %25 = arith.truncf %24 : vector<8x128xf32> to vector<8x128xbf16>
    %c0_9 = arith.constant 0 : index
    %c0_10 = arith.constant 0 : index
    %26 = vector.load %arg5[%c0_9, %c0_10] : memref<128x128xbf16, #tpu.memory_space<vmem>>, vector<128x128xbf16>
    %cst_11 = arith.constant dense<0.000000e+00> : vector<8x128xf32>
    %27 = tpu.matmul %25, %26, %cst_11 {dimension_numbers = #tpu.dot_dimension_numbers<[1], [0], [0], [1], [0, 0, 1, 1], [], []>} : vector<8x128xbf16>, vector<128x128xbf16>, vector<8x128xf32> -> vector<8x128xf32>
    %c0_12 = arith.constant 0 : index
    %c0_13 = arith.constant 0 : index
    %28 = vector.load %arg6[%c0_12, %c0_13] : memref<1x128xf32, #tpu.memory_space<vmem>>, vector<1x128xf32>
    %29 = vector.broadcast %28 : vector<1x128xf32> to vector<8x128xf32>
    %30 = arith.addf %27, %29 : vector<8x128xf32>
    %31 = tpu.iota {dimensions = array<i32: 1>} : vector<8x128xi32>
    %c4_i32 = arith.constant 4 : i32
    %32 = vector.broadcast %c4_i32 : i32 to vector<8x128xi32>
    %33 = arith.cmpi slt, %31, %32 : vector<8x128xi32>
    %cst_14 = arith.constant -1.000000e+30 : f32
    %34 = vector.broadcast %cst_14 : f32 to vector<8x128xf32>
    %35 = arith.select %33, %30, %34 : vector<8x128xi1>, vector<8x128xf32>
    %cst_15 = arith.constant dense<0xFF800000> : vector<8xf32>
    %36 = vector.multi_reduction <maximumf>, %35, %cst_15 [1] : vector<8x128xf32> to vector<8xf32>
    %37 = vector.shape_cast %36 : vector<8xf32> to vector<8x1xf32>
    %38 = vector.broadcast %37 : vector<8x1xf32> to vector<8x128xf32>
    %39 = arith.subf %35, %38 : vector<8x128xf32>
    %40 = math.exp %39 : vector<8x128xf32>
    %cst_16 = arith.constant dense<0.000000e+00> : vector<8xf32>
    %41 = vector.multi_reduction <add>, %40, %cst_16 [1] : vector<8x128xf32> to vector<8xf32>
    %42 = vector.shape_cast %41 : vector<8xf32> to vector<8x1xf32>
    %43 = math.log %42 : vector<8x1xf32>
    %44 = arith.addf %43, %37 : vector<8x1xf32>
    %45 = vector.broadcast %44 : vector<8x1xf32> to vector<8x128xf32>
    %46 = arith.subf %35, %45 : vector<8x128xf32>
    %c0_17 = arith.constant 0 : index
    %c0_18 = arith.constant 0 : index
    %47 = vector.load %arg7[%c0_17, %c0_18] : memref<8x128xf32, #tpu.memory_space<vmem>>, vector<8x128xf32>
    tpu.vector_store %arg7[%c0_17, %c0_18], %46 {strides = array<i32>} : memref<8x128xf32, #tpu.memory_space<vmem>>, vector<8x128xf32>,
    return
  }
  func.func @transform_0(%arg0: i32) -> (i32, i32) {
    %c0_i32 = arith.constant 0 : i32
    %c0_i32_0 = arith.constant 0 : i32
    return %arg0, %c0_i32 : i32, i32
  }
  func.func @transform_1(%arg0: i32) -> (i32, i32) {
    %c0_i32 = arith.constant 0 : i32
    %c0_i32_0 = arith.constant 0 : i32
    %c0_i32_1 = arith.constant 0 : i32
    return %c0_i32, %c0_i32_0 : i32, i32
  }
  func.func @transform_2(%arg0: i32) -> (i32, i32) {
    %c0_i32 = arith.constant 0 : i32
    %c0_i32_0 = arith.constant 0 : i32
    %c0_i32_1 = arith.constant 0 : i32
    return %c0_i32, %c0_i32_0 : i32, i32
  }
  func.func @transform_3(%arg0: i32) -> (i32, i32) {
    %c0_i32 = arith.constant 0 : i32
    %c0_i32_0 = arith.constant 0 : i32
    %c0_i32_1 = arith.constant 0 : i32
    return %c0_i32, %c0_i32_0 : i32, i32
  }
  func.func @transform_4(%arg0: i32) -> (i32, i32) {
    %c0_i32 = arith.constant 0 : i32
    %c0_i32_0 = arith.constant 0 : i32
    %c0_i32_1 = arith.constant 0 : i32
    return %c0_i32, %c0_i32_0 : i32, i32
  }
  func.func @transform_5(%arg0: i32) -> (i32, i32) {
    %c0_i32 = arith.constant 0 : i32
    %c0_i32_0 = arith.constant 0 : i32
    %c0_i32_1 = arith.constant 0 : i32
    return %c0_i32, %c0_i32_0 : i32, i32
  }
  func.func @transform_6(%arg0: i32) -> (i32, i32) {
    %c0_i32 = arith.constant 0 : i32
    %c0_i32_0 = arith.constant 0 : i32
    return %arg0, %c0_i32 : i32, i32
  }
}

</mosaic_0001>

<llo_original>
// kernel: tpu_custom_call.1
$region0: #{tpu_custom_call.1}
  #allocation0 [shape = 'u32[]', space=smem, size = 0x4, offset = 0x4, fixed_abs, tag = 'smem constant byte address 0x4 - core index']
  #allocation1 [shape = 'u32[144,128]{1,0:T(1,128)}', space=vmem, size = 0x12000, scoped, tag = 'internal scratch']
  %s0 = inlined_call_operand.vmem [shape: bf16[128,32], index: 0, kind: input, shape index: {}]
  %s1 = inlined_call_operand.hbm [shape: bf16[32,384], index: 1, kind: input, shape index: {}]
  %s2 = inlined_call_operand.vmem [shape: f32[1,128], index: 2, kind: input, shape index: {}]
  %s3 = inlined_call_operand.vmem [shape: f32[16,128], index: 3, kind: input, shape index: {}]
  %s4 = inlined_call_operand.vmem [shape: bf16[128,128], index: 4, kind: input, shape index: {}]
  %s5 = inlined_call_operand.vmem [shape: f32[1,128], index: 5, kind: input, shape index: {}]
  %s6 = inlined_call_operand.hbm [shape: f32[8,128], index: 6, kind: output, shape index: {}]
  %s7 = sld [smem:[#allocation0]]
  $region38: #{tpu_custom_call.1} parent=0
    _
  %s9 = ssub.s32 1, %s7
  %s10 = scalar_select 0, %s9, %s7
  $region1: #{tpu_custom_call.1} parent=0
    #allocation2 [shape = 'u8[24576]{0}', space=vmem, size = 0x6000, scoped, tag = 'input window, operand 1, single buffered']
    #allocation3 [shape = 's32[1]{0}', space=sflag, size = 0x4, scoped, tag = 'scoped memory for tpu_custom_call.1']
    #allocation4 [shape = 's32[1]{0}', space=sflag, size = 0x4, scoped, tag = 'scoped memory for tpu_custom_call.1']
    #allocation5 [shape = 'u8[4096]{0}', space=vmem, size = 0x1000, scoped, tag = 'output window, operand 0, single buffered']
    %11 = vsyncpa [#allocation3], 0
    %12 = vsyncpa [#allocation4], 0
    // Predicated region
    $region2: #{tpu_custom_call.1} parent=1 // pred_check
      _
    $region3: #{tpu_custom_call.1} parent=1 // pred_check_branch
      %14 = sbr.rel (0) target = $region5
    $region4: #{tpu_custom_call.1} parent=1 // pred_region
      _
    $region5: #{tpu_custom_call.1} parent=1 // pred_fallthru
      _
    // Predicated region
    $region6: #{tpu_custom_call.1} parent=1 // pred_check
      _
    $region7: #{tpu_custom_call.1} parent=1 // pred_check_branch
      %16 = sbr.rel (0) target = $region9
    $region8: #{tpu_custom_call.1} parent=1 // pred_region
      %s18 = ssub.s32 768, 768
      %19 = vsyncadd [#allocation3], %s18
      %s20 = sshll.u32 [#allocation2], 4
      %s21 = int_to_ptr.vmem [resolvable:$true] %s20
      %26 = dma.hbm_to_vmem [thread:$0]  %s1, 768, %s21, [#allocation3], 192, 192, 12
    $region9: #{tpu_custom_call.1} parent=1 // pred_fallthru
      _
    // Predicated region
    $region10: #{tpu_custom_call.1} parent=1 // pred_check
      _
    $region11: #{tpu_custom_call.1} parent=1 // pred_check_branch
      %28 = sbr.rel (0) target = $region13
    $region12: #{tpu_custom_call.1} parent=1 // pred_region
      _
    $region13: #{tpu_custom_call.1} parent=1 // pred_fallthru
      _
    // Predicated region
    $region14: #{tpu_custom_call.1} parent=1 // pred_check
      _
    $region15: #{tpu_custom_call.1} parent=1 // pred_check_branch
      %30 = sbr.rel (0) target = $region17
    $region16: #{tpu_custom_call.1} parent=1 // pred_region
      _
    $region17: #{tpu_custom_call.1} parent=1 // pred_fallthru
      _
    // Predicated region
    $region18: #{tpu_custom_call.1} parent=1 // pred_check
      _
    $region19: #{tpu_custom_call.1} parent=1 // pred_check_branch
      %32 = sbr.rel (0) target = $region21
    $region20: #{tpu_custom_call.1} parent=1 // pred_region
      _
    $region21: #{tpu_custom_call.1} parent=1 // pred_fallthru
      _
    // Predicated region
    $region22: #{tpu_custom_call.1} parent=1 // pred_check
      _
    $region23: #{tpu_custom_call.1} parent=1 // pred_check_branch
      %34 = sbr.rel (0) target = $region25
    $region24: #{tpu_custom_call.1} parent=1 // pred_region
      _
    $region25: #{tpu_custom_call.1} parent=1 // pred_fallthru
      _
    // Predicated region
    $region26: #{tpu_custom_call.1} parent=1 // pred_check
      _
    $region27: #{tpu_custom_call.1} parent=1 // pred_check_branch
      %36 = sbr.rel (0) target = $region29
    $region28: #{tpu_custom_call.1} parent=1 // pred_region
      %37 = dma.done [#allocation3], 768
    $region29: #{tpu_custom_call.1} parent=1 // pred_fallthru
      _
    %v39 = vld [vmem:[%s0] sm:$0xf]
    %v40 = vld [vmem:[%s0 + $0x4] sm:$0xf]
    %v41 = vld [vmem:[%s0 + $0x8] sm:$0xf]
    %v42 = vld [vmem:[%s0 + $0xc] sm:$0xf]
    %v43 = vld [vmem:[%s0 + $0x10] sm:$0xf]
    %v44 = vld [vmem:[%s0 + $0x14] sm:$0xf]
    %v45 = vld [vmem:[%s0 + $0x18] sm:$0xf]
    %v46 = vld [vmem:[%s0 + $0x1c] sm:$0xf]
    %v47 = vld [vmem:[%s0 + $0x20] sm:$0xf]
    %v48 = vld [vmem:[%s0 + $0x24] sm:$0xf]
    %v49 = vld [vmem:[%s0 + $0x28] sm:$0xf]
    %v50 = vld [vmem:[%s0 + $0x2c] sm:$0xf]
    %v51 = vld [vmem:[%s0 + $0x30] sm:$0xf]
    %v52 = vld [vmem:[%s0 + $0x34] sm:$0xf]
    %v53 = vld [vmem:[%s0 + $0x38] sm:$0xf]
    %v54 = vld [vmem:[%s0 + $0x3c] sm:$0xf]
    %v55 = vld [vmem:[#allocation2] sm:$0xff]
    %v56 = vld [vmem:[#allocation2 + $0x8] sm:$0xf]
    %v57 = vld [vmem:[#allocation2 + $0xc] sm:$0xff]
    %v58 = vld [vmem:[#allocation2 + $0x14] sm:$0xf]
    %v59 = vld [vmem:[#allocation2 + $0x18] sm:$0xff]
    %v60 = vld [vmem:[#allocation2 + $0x20] sm:$0xf]
    %v61 = vld [vmem:[#allocation2 + $0x24] sm:$0xff]
    %v62 = vld [vmem:[#allocation2 + $0x2c] sm:$0xf]
    %v79 = vunpack.c.l.b16 %v39
    %v80 = vunpack.c.l.b16 %v40
    %v81 = vunpack.c.l.b16 %v41
    %v82 = vunpack.c.l.b16 %v42
    %v83 = vunpack.c.l.b16 %v43
    %v84 = vunpack.c.l.b16 %v44
    %v85 = vunpack.c.l.b16 %v45
    %v86 = vunpack.c.l.b16 %v46
    %v87 = vunpack.c.l.b16 %v47
    %v88 = vunpack.c.l.b16 %v48
    %v89 = vunpack.c.l.b16 %v49
    %v90 = vunpack.c.l.b16 %v50
    %v91 = vunpack.c.l.b16 %v51
    %v92 = vunpack.c.l.b16 %v52
    %v93 = vunpack.c.l.b16 %v53
    %v94 = vunpack.c.l.b16 %v54
    %v95 = vpack.c.b16 %v80, %v79
    %v96 = vpack.c.b16 %v82, %v81
    %v97 = vpack.c.b16 %v84, %v83
    %v98 = vpack.c.b16 %v86, %v85
    %v99 = vpack.c.b16 %v88, %v87
    %v100 = vpack.c.b16 %v90, %v89
    %v101 = vpack.c.b16 %v92, %v91
    %v102 = vpack.c.b16 %v94, %v93
    %v111 = vunpack.c.l.b16 %v55
    %v112 = vunpack.c.h.b16 %v55
    %v113 = vunpack.c.l.b16 %v56
    %v114 = vunpack.c.l.b16 %v57
    %v115 = vunpack.c.h.b16 %v57
    %v116 = vunpack.c.l.b16 %v58
    %v117 = vunpack.c.l.b16 %v59
    %v118 = vunpack.c.h.b16 %v59
    %v119 = vunpack.c.l.b16 %v60
    %v120 = vunpack.c.l.b16 %v61
    %v121 = vunpack.c.h.b16 %v61
    %v122 = vunpack.c.l.b16 %v62
    %v123 = vpack.c.b16 %v114, %v111
    %v124 = vpack.c.b16 %v115, %v112
    %v125 = vpack.c.b16 %v116, %v113
    %v126 = vpack.c.b16 %v120, %v117
    %v127 = vpack.c.b16 %v121, %v118
    %v128 = vpack.c.b16 %v122, %v119
    %vm135 = vcmask 261120
    %v137 = vsel %vm135, %v95, 0
    %v140 = vsel %vm135, %v96, 0
    %v143 = vsel %vm135, %v97, 0
    %v146 = vsel %vm135, %v98, 0
    %v149 = vsel %vm135, %v99, 0
    %v152 = vsel %vm135, %v100, 0
    %v155 = vsel %vm135, %v101, 0
    %v158 = vsel %vm135, %v102, 0
    %160 = vmatprep.subr.bf16.mxu0 %v124
    %161 = vmatpush1.bf16.msra.mxu0 %v123
    %162 = vmatprep.subr.bf16.mxu0 %v127
    %163 = vmatpush1.bf16.msra.mxu0 %v126
    %164 = vmatprep.subr.bf16.mxu0 0
    %165 = vmatpush1.bf16.msra.mxu0 0
    %166 = vmatprep.subr.bf16.mxu0 0
    %167 = vmatpush1.bf16.msra.mxu0 0
    %168 = vmatprep.subr.bf16.mxu0 0
    %169 = vmatpush1.bf16.msra.mxu0 0
    %170 = vmatprep.subr.bf16.mxu0 0
    %171 = vmatpush1.bf16.msra.mxu0 0
    %172 = vmatprep.subr.bf16.mxu0 0
    %173 = vmatpush1.bf16.msra.mxu0 0
    %174 = vmatprep.subr.bf16.mxu0 0
    %175 = vmatpush1.bf16.msra.mxu0 0
    %176 = vmatprep.subr.bf16.mxu0 0
    %177 = vmatpush1.bf16.msra.mxu0 0
    %178 = vmatprep.subr.bf16.mxu0 0
    %179 = vmatpush1.bf16.msra.mxu0 0
    %180 = vmatprep.subr.bf16.mxu0 0
    %181 = vmatpush1.bf16.msra.mxu0 0
    %182 = vmatprep.subr.bf16.mxu0 0
    %183 = vmatpush1.bf16.msra.mxu0 0
    %184 = vmatprep.subr.bf16.mxu0 0
    %185 = vmatpush1.bf16.msra.mxu0 0
    %186 = vmatprep.subr.bf16.mxu0 0
    %187 = vmatpush1.bf16.msra.mxu0 0
    %188 = vmatprep.subr.bf16.mxu0 0
    %189 = vmatpush1.bf16.msra.mxu0 0
    %190 = vmatprep.subr.bf16.mxu0 0
    %191 = vmatpush1.bf16.msra.mxu0 0
    %192 = vmatprep.mubr.bf16.mxu0 0
    %193 = vmatmul.mubr.bf16.gmra.mrb[0].mxu0 %v137
    %v194 = vpop.f32.mrb[0].mxu0
    %v195 = vadd.f32 0.0, %v194
    %v196 = vpop.f32.mrb[0].mxu0
    %v197 = vadd.f32 0.0, %v196
    %v198 = vpop.f32.mrb[0].mxu0
    %v199 = vadd.f32 0.0, %v198
    %v200 = vpop.f32.mrb[0].mxu0
    %v201 = vadd.f32 0.0, %v200
    %202 = vmatprep.mubr.bf16.mxu0 0
    %203 = vmatmul.mubr.bf16.gmra.mrb[0].mxu0 %v140
    %v204 = vpop.f32.mrb[0].mxu0
    %v205 = vadd.f32 0.0, %v204
    %v206 = vpop.f32.mrb[0].mxu0
    %v207 = vadd.f32 0.0, %v206
    %v208 = vpop.f32.mrb[0].mxu0
    %v209 = vadd.f32 0.0, %v208
    %v210 = vpop.f32.mrb[0].mxu0
    %v211 = vadd.f32 0.0, %v210
    %212 = vmatprep.mubr.bf16.mxu0 0
    %213 = vmatmul.mubr.bf16.gmra.mrb[0].mxu0 %v143
    %v214 = vpop.f32.mrb[0].mxu0
    %v215 = vadd.f32 0.0, %v214
    %v216 = vpop.f32.mrb[0].mxu0
    %v217 = vadd.f32 0.0, %v216
    %v218 = vpop.f32.mrb[0].mxu0
    %v219 = vadd.f32 0.0, %v218
    %v220 = vpop.f32.mrb[0].mxu0
    %v221 = vadd.f32 0.0, %v220
    %222 = vmatprep.mubr.bf16.mxu0 0
    %223 = vmatmul.mubr.bf16.gmra.mrb[0].mxu0 %v146
    %v224 = vpop.f32.mrb[0].mxu0
    %v225 = vadd.f32 0.0, %v224
    %v226 = vpop.f32.mrb[0].mxu0
    %v227 = vadd.f32 0.0, %v226
    %v228 = vpop.f32.mrb[0].mxu0
    %v229 = vadd.f32 0.0, %v228
    %v230 = vpop.f32.mrb[0].mxu0
    %v231 = vadd.f32 0.0, %v230
    %232 = vmatprep.mubr.bf16.mxu0 0
    %233 = vmatmul.mubr.bf16.gmra.mrb[0].mxu0 %v149
    %v234 = vpop.f32.mrb[0].mxu0
    %v235 = vadd.f32 0.0, %v234
    %v236 = vpop.f32.mrb[0].mxu0
    %v237 = vadd.f32 0.0, %v236
    %v238 = vpop.f32.mrb[0].mxu0
    %v239 = vadd.f32 0.0, %v238
    %v240 = vpop.f32.mrb[0].mxu0
    %v241 = vadd.f32 0.0, %v240
    %242 = vmatprep.mubr.bf16.mxu0 0
    %243 = vmatmul.mubr.bf16.gmra.mrb[0].mxu0 %v152
    %v244 = vpop.f32.mrb[0].mxu0
    %v245 = vadd.f32 0.0, %v244
    %v246 = vpop.f32.mrb[0].mxu0
    %v247 = vadd.f32 0.0, %v246
    %v248 = vpop.f32.mrb[0].mxu0
    %v249 = vadd.f32 0.0, %v248
    %v250 = vpop.f32.mrb[0].mxu0
    %v251 = vadd.f32 0.0, %v250
    %252 = vmatprep.mubr.bf16.mxu0 0
    %253 = vmatmul.mubr.bf16.gmra.mrb[0].mxu0 %v155
    %v254 = vpop.f32.mrb[0].mxu0
    %v255 = vadd.f32 0.0, %v254
    %v256 = vpop.f32.mrb[0].mxu0
    %v257 = vadd.f32 0.0, %v256
    %v258 = vpop.f32.mrb[0].mxu0
    %v259 = vadd.f32 0.0, %v258
    %v260 = vpop.f32.mrb[0].mxu0
    %v261 = vadd.f32 0.0, %v260
    %262 = vmatprep.mubr.bf16.mxu0 0
    %263 = vmatmul.mubr.bf16.gmra.mrb[0].mxu0 %v158
    %v264 = vpop.f32.mrb[0].mxu0
    %v265 = vadd.f32 0.0, %v264
    %v266 = vpop.f32.mrb[0].mxu0
    %v267 = vadd.f32 0.0, %v266
    %v268 = vpop.f32.mrb[0].mxu0
    %v269 = vadd.f32 0.0, %v268
    %v270 = vpop.f32.mrb[0].mxu0
    %v271 = vadd.f32 0.0, %v270
    %272 = vdwg.mxu0
    %273 = vmatprep.subr.bf16.mxu0 0
    %274 = vmatpush1.bf16.msra.mxu0 %v125
    %275 = vmatprep.subr.bf16.mxu0 0
    %276 = vmatpush1.bf16.msra.mxu0 %v128
    %277 = vmatprep.subr.bf16.mxu0 0
    %278 = vmatpush1.bf16.msra.mxu0 0
    %279 = vmatprep.subr.bf16.mxu0 0
    %280 = vmatpush1.bf16.msra.mxu0 0
    %281 = vmatprep.subr.bf16.mxu0 0
    %282 = vmatpush1.bf16.msra.mxu0 0
    %283 = vmatprep.subr.bf16.mxu0 0
    %284 = vmatpush1.bf16.msra.mxu0 0
    %285 = vmatprep.subr.bf16.mxu0 0
    %286 = vmatpush1.bf16.msra.mxu0 0
    %287 = vmatprep.subr.bf16.mxu0 0
    %288 = vmatpush1.bf16.msra.mxu0 0
    %289 = vmatprep.subr.bf16.mxu0 0
    %290 = vmatpush1.bf16.msra.mxu0 0
    %291 = vmatprep.subr.bf16.mxu0 0
    %292 = vmatpush1.bf16.msra.mxu0 0
    %293 = vmatprep.subr.bf16.mxu0 0
    %294 = vmatpush1.bf16.msra.mxu0 0
    %295 = vmatprep.subr.bf16.mxu0 0
    %296 = vmatpush1.bf16.msra.mxu0 0
    %297 = vmatprep.subr.bf16.mxu0 0
    %298 = vmatpush1.bf16.msra.mxu0 0
    %299 = vmatprep.subr.bf16.mxu0 0
    %300 = vmatpush1.bf16.msra.mxu0 0
    %301 = vmatprep.subr.bf16.mxu0 0
    %302 = vmatpush1.bf16.msra.mxu0 0
    %303 = vmatprep.subr.bf16.mxu0 0
    %304 = vmatpush1.bf16.msra.mxu0 0
    %305 = vmatprep.mubr.bf16.mxu0 0
    %306 = vmatmul.mubr.bf16.gmra.mrb[0].mxu0 %v137
    %v307 = vpop.f32.mrb[0].mxu0
    %v308 = vadd.f32 0.0, %v307
    %v309 = vpop.f32.mrb[0].mxu0
    %v310 = vpop.f32.mrb[0].mxu0
    %v311 = vadd.f32 0.0, %v310
    %v312 = vpop.f32.mrb[0].mxu0
    %313 = vmatprep.mubr.bf16.mxu0 0
    %314 = vmatmul.mubr.bf16.gmra.mrb[0].mxu0 %v140
    %v315 = vpop.f32.mrb[0].mxu0
    %v316 = vadd.f32 0.0, %v315
    %v317 = vpop.f32.mrb[0].mxu0
    %v318 = vpop.f32.mrb[0].mxu0
    %v319 = vadd.f32 0.0, %v318
    %v320 = vpop.f32.mrb[0].mxu0
    %321 = vmatprep.mubr.bf16.mxu0 0
    %322 = vmatmul.mubr.bf16.gmra.mrb[0].mxu0 %v143
    %v323 = vpop.f32.mrb[0].mxu0
    %v324 = vadd.f32 0.0, %v323
    %v325 = vpop.f32.mrb[0].mxu0
    %v326 = vpop.f32.mrb[0].mxu0
    %v327 = vadd.f32 0.0, %v326
    %v328 = vpop.f32.mrb[0].mxu0
    %329 = vmatprep.mubr.bf16.mxu0 0
    %330 = vmatmul.mubr.bf16.gmra.mrb[0].mxu0 %v146
    %v331 = vpop.f32.mrb[0].mxu0
    %v332 = vadd.f32 0.0, %v331
    %v333 = vpop.f32.mrb[0].mxu0
    %v334 = vpop.f32.mrb[0].mxu0
    %v335 = vadd.f32 0.0, %v334
    %v336 = vpop.f32.mrb[0].mxu0
    %337 = vmatprep.mubr.bf16.mxu0 0
    %338 = vmatmul.mubr.bf16.gmra.mrb[0].mxu0 %v149
    %v339 = vpop.f32.mrb[0].mxu0
    %v340 = vadd.f32 0.0, %v339
    %v341 = vpop.f32.mrb[0].mxu0
    %v342 = vpop.f32.mrb[0].mxu0
    %v343 = vadd.f32 0.0, %v342
    %v344 = vpop.f32.mrb[0].mxu0
    %345 = vmatprep.mubr.bf16.mxu0 0
    %346 = vmatmul.mubr.bf16.gmra.mrb[0].mxu0 %v152
    %v347 = vpop.f32.mrb[0].mxu0
    %v348 = vadd.f32 0.0, %v347
    %v349 = vpop.f32.mrb[0].mxu0
    %v350 = vpop.f32.mrb[0].mxu0
    %v351 = vadd.f32 0.0, %v350
    %v352 = vpop.f32.mrb[0].mxu0
    %353 = vmatprep.mubr.bf16.mxu0 0
    %354 = vmatmul.mubr.bf16.gmra.mrb[0].mxu0 %v155
    %v355 = vpop.f32.mrb[0].mxu0
    %v356 = vadd.f32 0.0, %v355
    %v357 = vpop.f32.mrb[0].mxu0
    %v358 = vpop.f32.mrb[0].mxu0
    %v359 = vadd.f32 0.0, %v358
    %v360 = vpop.f32.mrb[0].mxu0
    %361 = vmatprep.mubr.bf16.mxu0 0
    %362 = vmatmul.mubr.bf16.gmra.mrb[0].mxu0 %v158
    %v363 = vpop.f32.mrb[0].mxu0
    %v364 = vadd.f32 0.0, %v363
    %v365 = vpop.f32.mrb[0].mxu0
    %v366 = vpop.f32.mrb[0].mxu0
    %v367 = vadd.f32 0.0, %v366
    %v368 = vpop.f32.mrb[0].mxu0
    %369 = vdwg.mxu0
    %v370 = vrot.slane %v197, 1
    %v371 = vrot.slane %v201, 1
    %v372 = vrot.slane %v207, 1
    %v373 = vrot.slane %v211, 1
    %v374 = vrot.slane %v217, 1
    %v375 = vrot.slane %v221, 1
    %v376 = vrot.slane %v227, 1
    %v377 = vrot.slane %v231, 1
    %v378 = vrot.slane %v237, 1
    %v379 = vrot.slane %v241, 1
    %v380 = vrot.slane %v247, 1
    %v381 = vrot.slane %v251, 1
    %v382 = vrot.slane %v257, 1
    %v383 = vrot.slane %v261, 1
    %v384 = vrot.slane %v267, 1
    %v385 = vrot.slane %v271, 1
    %v386 = vlaneseq
    %v387 = vshrl.u32 %v386, 7
    %vm388 = vcmp.lt.s32.totalorder %v387, 7
    %v389 = vsel %vm388, %v384, %v385
    %v390 = vsel %vm388, %v383, %v384
    %v391 = vsel %vm388, %v382, %v383
    %v392 = vsel %vm388, %v381, %v382
    %v393 = vsel %vm388, %v380, %v381
    %v394 = vsel %vm388, %v379, %v380
    %v395 = vsel %vm388, %v378, %v379
    %v396 = vsel %vm388, %v377, %v378
    %v397 = vsel %vm388, %v376, %v377
    %v398 = vsel %vm388, %v375, %v376
    %v399 = vsel %vm388, %v374, %v375
    %v400 = vsel %vm388, %v373, %v374
    %v401 = vsel %vm388, %v372, %v373
    %v402 = vsel %vm388, %v371, %v372
    %v403 = vsel %vm388, %v370, %v371
    %v404 = vsel %vm388, %v385, %v370
    %v405 = vadd.f32 %v195, %v403
    %v406 = vadd.f32 %v199, %v402
    %v407 = vadd.f32 %v205, %v401
    %v408 = vadd.f32 %v209, %v400
    %v409 = vadd.f32 %v215, %v399
    %v410 = vadd.f32 %v219, %v398
    %v411 = vadd.f32 %v225, %v397
    %v412 = vadd.f32 %v229, %v396
    %v413 = vadd.f32 %v235, %v395
    %v414 = vadd.f32 %v239, %v394
    %v415 = vadd.f32 %v245, %v393
    %v416 = vadd.f32 %v249, %v392
    %v417 = vadd.f32 %v255, %v391
    %v418 = vadd.f32 %v259, %v390
    %v419 = vadd.f32 %v265, %v389
    %v420 = vadd.f32 %v269, %v404
    %v421 = vrot.slane %v308, 2
    %v422 = vrot.slane %v311, 2
    %v423 = vrot.slane %v316, 2
    %v424 = vrot.slane %v319, 2
    %v425 = vrot.slane %v324, 2
    %v426 = vrot.slane %v327, 2
    %v427 = vrot.slane %v332, 2
    %v428 = vrot.slane %v335, 2
    %v429 = vrot.slane %v340, 2
    %v430 = vrot.slane %v343, 2
    %v431 = vrot.slane %v348, 2
    %v432 = vrot.slane %v351, 2
    %v433 = vrot.slane %v356, 2
    %v434 = vrot.slane %v359, 2
    %v435 = vrot.slane %v364, 2
    %v436 = vrot.slane %v367, 2
    %vm437 = vcmp.lt.s32.totalorder %v387, 6
    %v438 = vsel %vm437, %v435, %v436
    %v439 = vsel %vm437, %v434, %v435
    %v440 = vsel %vm437, %v433, %v434
    %v441 = vsel %vm437, %v432, %v433
    %v442 = vsel %vm437, %v431, %v432
    %v443 = vsel %vm437, %v430, %v431
    %v444 = vsel %vm437, %v429, %v430
    %v445 = vsel %vm437, %v428, %v429
    %v446 = vsel %vm437, %v427, %v428
    %v447 = vsel %vm437, %v426, %v427
    %v448 = vsel %vm437, %v425, %v426
    %v449 = vsel %vm437, %v424, %v425
    %v450 = vsel %vm437, %v423, %v424
    %v451 = vsel %vm437, %v422, %v423
    %v452 = vsel %vm437, %v421, %v422
    %v453 = vsel %vm437, %v436, %v421
    %v454 = vadd.f32 %v405, %v452
    %v455 = vadd.f32 %v406, %v451
    %v456 = vadd.f32 %v407, %v450
    %v457 = vadd.f32 %v408, %v449
    %v458 = vadd.f32 %v409, %v448
    %v459 = vadd.f32 %v410, %v447
    %v460 = vadd.f32 %v411, %v446
    %v461 = vadd.f32 %v412, %v445
    %v462 = vadd.f32 %v413, %v444
    %v463 = vadd.f32 %v414, %v443
    %v464 = vadd.f32 %v415, %v442
    %v465 = vadd.f32 %v416, %v441
    %v466 = vadd.f32 %v417, %v440
    %v467 = vadd.f32 %v418, %v439
    %v468 = vadd.f32 %v419, %v438
    %v469 = vadd.f32 %v420, %v453
    %v470 = vld [vmem:[%s2] sm:$0x1]
    %v472 = vlaneseq
    %v473 = vshrl.u32 %v472, 7
    %v474 = vsub.s32 0, %v473
    %v475 = vrot.slane %v470, %v474
    %v477 = vadd.f32 %v454, %v475
    %v478 = vadd.f32 %v455, %v475
    %v479 = vadd.f32 %v456, %v475
    %v480 = vadd.f32 %v457, %v475
    %v481 = vadd.f32 %v458, %v475
    %v482 = vadd.f32 %v459, %v475
    %v483 = vadd.f32 %v460, %v475
    %v484 = vadd.f32 %v461, %v475
    %v485 = vadd.f32 %v462, %v475
    %v486 = vadd.f32 %v463, %v475
    %v487 = vadd.f32 %v464, %v475
    %v488 = vadd.f32 %v465, %v475
    %v489 = vadd.f32 %v466, %v475
    %v490 = vadd.f32 %v467, %v475
    %v491 = vadd.f32 %v468, %v475
    %v492 = vadd.f32 %v469, %v475
    %v493 = vmax.f32 %v477, 0.0
    %v494 = vmax.f32 %v478, 0.0
    %v495 = vmax.f32 %v479, 0.0
    %v496 = vmax.f32 %v480, 0.0
    %v497 = vmax.f32 %v481, 0.0
    %v498 = vmax.f32 %v482, 0.0
    %v499 = vmax.f32 %v483, 0.0
    %v500 = vmax.f32 %v484, 0.0
    %v501 = vmax.f32 %v485, 0.0
    %v502 = vmax.f32 %v486, 0.0
    %v503 = vmax.f32 %v487, 0.0
    %v504 = vmax.f32 %v488, 0.0
    %v505 = vmax.f32 %v489, 0.0
    %v506 = vmax.f32 %v490, 0.0
    %v507 = vmax.f32 %v491, 0.0
    %v508 = vmax.f32 %v492, 0.0
    %v509 = vld [vmem:[%s3] sm:$0xff]
    %v510 = vld [vmem:[%s3 + $0x8] sm:$0xff]
    %v511 = vmul.f32 %v493, %v509
    %v512 = vmul.f32 %v494, %v510
    %v513 = vmul.f32 %v495, %v509
    %v514 = vmul.f32 %v496, %v510
    %v515 = vmul.f32 %v497, %v509
    %v516 = vmul.f32 %v498, %v510
    %v517 = vmul.f32 %v499, %v509
    %v518 = vmul.f32 %v500, %v510
    %v519 = vmul.f32 %v501, %v509
    %v520 = vmul.f32 %v502, %v510
    %v521 = vmul.f32 %v503, %v509
    %v522 = vmul.f32 %v504, %v510
    %v523 = vmul.f32 %v505, %v509
    %v524 = vmul.f32 %v506, %v510
    %v525 = vmul.f32 %v507, %v509
    %v526 = vmul.f32 %v508, %v510
    %v527 = vmax.f32 %v511, %v512
    %v528 = vrot.slane %v527, 4
    %v529 = vmax.f32 %v527, %v528
    %v530 = vrot.slane %v529, 2
    %v531 = vmax.f32 %v529, %v530
    %v532 = vrot.slane %v531, 1
    %v533 = vmax.f32 %v531, %v532
    %v534 = vmax.f32 %v513, %v514
    %v535 = vrot.slane %v534, 4
    %v536 = vmax.f32 %v534, %v535
    %v537 = vrot.slane %v536, 2
    %v538 = vmax.f32 %v536, %v537
    %v539 = vrot.slane %v538, 1
    %v540 = vmax.f32 %v538, %v539
    %v541 = vmax.f32 %v515, %v516
    %v542 = vrot.slane %v541, 4
    %v543 = vmax.f32 %v541, %v542
    %v544 = vrot.slane %v543, 2
    %v545 = vmax.f32 %v543, %v544
    %v546 = vrot.slane %v545, 1
    %v547 = vmax.f32 %v545, %v546
    %v548 = vmax.f32 %v517, %v518
    %v549 = vrot.slane %v548, 4
    %v550 = vmax.f32 %v548, %v549
    %v551 = vrot.slane %v550, 2
    %v552 = vmax.f32 %v550, %v551
    %v553 = vrot.slane %v552, 1
    %v554 = vmax.f32 %v552, %v553
    %v555 = vmax.f32 %v519, %v520
    %v556 = vrot.slane %v555, 4
    %v557 = vmax.f32 %v555, %v556
    %v558 = vrot.slane %v557, 2
    %v559 = vmax.f32 %v557, %v558
    %v560 = vrot.slane %v559, 1
    %v561 = vmax.f32 %v559, %v560
    %v562 = vmax.f32 %v521, %v522
    %v563 = vrot.slane %v562, 4
    %v564 = vmax.f32 %v562, %v563
    %v565 = vrot.slane %v564, 2
    %v566 = vmax.f32 %v564, %v565
    %v567 = vrot.slane %v566, 1
    %v568 = vmax.f32 %v566, %v567
    %v569 = vmax.f32 %v523, %v524
    %v570 = vrot.slane %v569, 4
    %v571 = vmax.f32 %v569, %v570
    %v572 = vrot.slane %v571, 2
    %v573 = vmax.f32 %v571, %v572
    %v574 = vrot.slane %v573, 1
    %v575 = vmax.f32 %v573, %v574
    %v576 = vmax.f32 %v525, %v526
    %v577 = vrot.slane %v576, 4
    %v578 = vmax.f32 %v576, %v577
    %v579 = vrot.slane %v578, 2
    %v580 = vmax.f32 %v578, %v579
    %v581 = vrot.slane %v580, 1
    %v582 = vmax.f32 %v580, %v581
    %v583 = vpack.c.bf16 %v533, %v533
    %v584 = vpack.c.bf16 %v540, %v540
    %v585 = vpack.c.bf16 %v547, %v547
    %v586 = vpack.c.bf16 %v554, %v554
    %v587 = vpack.c.bf16 %v561, %v561
    %v588 = vpack.c.bf16 %v568, %v568
    %v589 = vpack.c.bf16 %v575, %v575
    %v590 = vpack.c.bf16 %v582, %v582
    %v591 = vld [vmem:[%s4] sm:$0xf]
    %v592 = vld [vmem:[%s4 + $0x4] sm:$0xf]
    %v593 = vld [vmem:[%s4 + $0x8] sm:$0xf]
    %v594 = vld [vmem:[%s4 + $0xc] sm:$0xf]
    %v595 = vld [vmem:[%s4 + $0x10] sm:$0xf]
    %v596 = vld [vmem:[%s4 + $0x14] sm:$0xf]
    %v597 = vld [vmem:[%s4 + $0x18] sm:$0xf]
    %v598 = vld [vmem:[%s4 + $0x1c] sm:$0xf]
    %v599 = vld [vmem:[%s4 + $0x20] sm:$0xf]
    %v600 = vld [vmem:[%s4 + $0x24] sm:$0xf]
    %v601 = vld [vmem:[%s4 + $0x28] sm:$0xf]
    %v602 = vld [vmem:[%s4 + $0x2c] sm:$0xf]
    %v603 = vld [vmem:[%s4 + $0x30] sm:$0xf]
    %v604 = vld [vmem:[%s4 + $0x34] sm:$0xf]
    %v605 = vld [vmem:[%s4 + $0x38] sm:$0xf]
    %v606 = vld [vmem:[%s4 + $0x3c] sm:$0xf]
    %v607 = vld [vmem:[%s5] sm:$0x1]
    %v609 = vlaneseq
    %v610 = vshrl.u32 %v609, 7
    %v611 = vsub.s32 0, %v610
    %v612 = vrot.slane %v607, %v611
    %v622 = vunpack.c.l.b16 %v583
    %v623 = vunpack.c.l.b16 %v584
    %v624 = vunpack.c.l.b16 %v585
    %v625 = vunpack.c.l.b16 %v586
    %v626 = vunpack.c.l.b16 %v587
    %v627 = vunpack.c.l.b16 %v588
    %v628 = vunpack.c.l.b16 %v589
    %v629 = vunpack.c.l.b16 %v590
    %vm630 = vcmask 1041409
    %v631 = vsel %vm630, %v623, %v622
    %vm632 = vcmask 1042434
    %v633 = vsel %vm632, %v624, %v631
    %vm634 = vcmask 1043459
    %v635 = vsel %vm634, %v625, %v633
    %vm636 = vcmask 1044484
    %v637 = vsel %vm636, %v626, %v635
    %vm638 = vcmask 1045509
    %v639 = vsel %vm638, %v627, %v637
    %vm640 = vcmask 1046534
    %v641 = vsel %vm640, %v628, %v639
    %vm642 = vcmask 1047559
    %v643 = vsel %vm642, %v629, %v641
    %v644 = vpack.c.b16 %v643, %v643
    %v662 = vunpack.c.l.b16 %v591
    %v663 = vunpack.c.l.b16 %v592
    %v664 = vunpack.c.l.b16 %v593
    %v665 = vunpack.c.l.b16 %v594
    %v666 = vunpack.c.l.b16 %v595
    %v667 = vunpack.c.l.b16 %v596
    %v668 = vunpack.c.l.b16 %v597
    %v669 = vunpack.c.l.b16 %v598
    %v670 = vunpack.c.l.b16 %v599
    %v671 = vunpack.c.l.b16 %v600
    %v672 = vunpack.c.l.b16 %v601
    %v673 = vunpack.c.l.b16 %v602
    %v674 = vunpack.c.l.b16 %v603
    %v675 = vunpack.c.l.b16 %v604
    %v676 = vunpack.c.l.b16 %v605
    %v677 = vunpack.c.l.b16 %v606
    %v678 = vpack.c.b16 %v663, %v662
    %v679 = vpack.c.b16 %v665, %v664
    %v680 = vpack.c.b16 %v667, %v666
    %v681 = vpack.c.b16 %v669, %v668
    %v682 = vpack.c.b16 %v671, %v670
    %v683 = vpack.c.b16 %v673, %v672
    %v684 = vpack.c.b16 %v675, %v674
    %v685 = vpack.c.b16 %v677, %v676
    %694 = vmatprep.subr.bf16.mxu0 0
    %695 = vmatpush1.bf16.msra.mxu0 %v678
    %696 = vmatprep.subr.bf16.mxu0 0
    %697 = vmatpush1.bf16.msra.mxu0 %v679
    %698 = vmatprep.subr.bf16.mxu0 0
    %699 = vmatpush1.bf16.msra.mxu0 %v680
    %700 = vmatprep.subr.bf16.mxu0 0
    %701 = vmatpush1.bf16.msra.mxu0 %v681
    %702 = vmatprep.subr.bf16.mxu0 0
    %703 = vmatpush1.bf16.msra.mxu0 %v682
    %704 = vmatprep.subr.bf16.mxu0 0
    %705 = vmatpush1.bf16.msra.mxu0 %v683
    %706 = vmatprep.subr.bf16.mxu0 0
    %707 = vmatpush1.bf16.msra.mxu0 %v684
    %708 = vmatprep.subr.bf16.mxu0 0
    %709 = vmatpush1.bf16.msra.mxu0 %v685
    %710 = vmatprep.subr.bf16.mxu0 0
    %711 = vmatpush1.bf16.msra.mxu0 0
    %712 = vmatprep.subr.bf16.mxu0 0
    %713 = vmatpush1.bf16.msra.mxu0 0
    %714 = vmatprep.subr.bf16.mxu0 0
    %715 = vmatpush1.bf16.msra.mxu0 0
    %716 = vmatprep.subr.bf16.mxu0 0
    %717 = vmatpush1.bf16.msra.mxu0 0
    %718 = vmatprep.subr.bf16.mxu0 0
    %719 = vmatpush1.bf16.msra.mxu0 0
    %720 = vmatprep.subr.bf16.mxu0 0
    %721 = vmatpush1.bf16.msra.mxu0 0
    %722 = vmatprep.subr.bf16.mxu0 0
    %723 = vmatpush1.bf16.msra.mxu0 0
    %724 = vmatprep.subr.bf16.mxu0 0
    %725 = vmatpush1.bf16.msra.mxu0 0
    %726 = vmatprep.mubr.bf16.mxu0 0
    %727 = vmatmul.mubr.bf16.gmra.mrb[0].mxu0 %v644
    %v728 = vpop.f32.mrb[0].mxu0
    %v729 = vadd.f32 %v612, %v728
    %v730 = vpop.f32.mrb[0].mxu0
    %v731 = vpop.f32.mrb[0].mxu0
    %v732 = vpop.f32.mrb[0].mxu0
    %733 = vdwg.mxu0
    %v734 = vlaneseq
    %v735 = vand.u32 %v734, 127
    %vm736 = vcmp.lt.s32.totalorder %v735, 4
    %v737 = vsel %vm736, %v729, -1e+30
    %738 = vmax.xlane.f32.xlu0 %v737
    %v739 = vpop.xlane.xlu0 %738
    %v740 = vsub.f32 %v737, %v739
    %v741 = vmul.f32 %v740, 1.442695
    %v742 = vpow.pop %v741
    %743 = vadd.xlane.f32.xlu0 %v742
    %v744 = vpop.xlane.xlu0 %743
    %v745 = vlog2.pop %v744
    %v746 = vmul.f32 %v745, 0.6931472
    %v747 = vadd.f32 %v746, %v739
    %v748 = vsub.f32 %v737, %v747
    %749 = vst [vmem:[#allocation5] sm:$0xff] %v748
    // Predicated region
    $region30: #{tpu_custom_call.1} parent=1 // pred_check
      _
    $region31: #{tpu_custom_call.1} parent=1 // pred_check_branch
      %751 = sbr.rel (0) target = $region33
    $region32: #{tpu_custom_call.1} parent=1 // pred_region
      %s753 = ssub.s32 128, 128
      %754 = vsyncadd [#allocation4], %s753
      %s756 = sshll.u32 [#allocation5], 4
      %s757 = int_to_ptr.vmem [resolvable:$true] %s756
      %759 = dma.vmem_to_hbm [thread:$0]  %s757, 128, %s6, [#allocation4]
    $region33: #{tpu_custom_call.1} parent=1 // pred_fallthru
      _
    // Predicated region
    $region34: #{tpu_custom_call.1} parent=1 // pred_check
      _
    $region35: #{tpu_custom_call.1} parent=1 // pred_check_branch
      %761 = sbr.rel (0) target = $region37
    $region36: #{tpu_custom_call.1} parent=1 // pred_region
      %762 = dma.done [#allocation4], 128
    $region37: #{tpu_custom_call.1} parent=1 // pred_fallthru
      _
    %763 = vsyncpa [#allocation3], 1
    %764 = vsyncpa [#allocation4], 1

// kernel: tpu_custom_call.1
$region0: #{tpu_custom_call.1}
  #allocation0 [shape = 'u32[]', space=smem, size = 0x4, offset = 0x4, fixed_abs, tag = 'smem constant byte address 0x4 - core index']
  #allocation1 [shape = 'u32[144,128]{1,0:T(1,128)}', space=vmem, size = 0x12000, scoped, tag = 'internal scratch']
  %s0 = inlined_call_operand.vmem [shape: bf16[128,32], index: 0, kind: input, shape index: {}]
  %s1 = inlined_call_operand.hbm [shape: bf16[32,384], index: 1, kind: input, shape index: {}]
  %s2 = inlined_call_operand.vmem [shape: f32[1,128], index: 2, kind: input, shape index: {}]
  %s3 = inlined_call_operand.vmem [shape: f32[16,128], index: 3, kind: input, shape index: {}]
  %s4 = inlined_call_operand.vmem [shape: bf16[128,128], index: 4, kind: input, shape index: {}]
  %s5 = inlined_call_operand.vmem [shape: f32[1,128], index: 5, kind: input, shape index: {}]
  %s6 = inlined_call_operand.hbm [shape: f32[8,128], index: 6, kind: output, shape index: {}]
  %s7 = sld [smem:[#allocation0]]
  $region38: #{tpu_custom_call.1} parent=0
    _
  %s9 = ssub.s32 1, %s7
  %s10 = scalar_select 0, %s9, %s7
  $region1: #{tpu_custom_call.1} parent=0
    #allocation2 [shape = 'u8[24576]{0}', space=vmem, size = 0x6000, scoped, tag = 'input window, operand 1, single buffered']
    #allocation3 [shape = 's32[1]{0}', space=sflag, size = 0x4, scoped, tag = 'scoped memory for tpu_custom_call.1']
    #allocation4 [shape = 's32[1]{0}', space=sflag, size = 0x4, scoped, tag = 'scoped memory for tpu_custom_call.1']
    #allocation5 [shape = 'u8[4096]{0}', space=vmem, size = 0x1000, scoped, tag = 'output window, operand 0, single buffered']
    %11 = vsyncpa [#allocation3], 0
    %12 = vsyncpa [#allocation4], 0
    // Predicated region
    $region2: #{tpu_custom_call.1} parent=1 // pred_check
      _
    $region3: #{tpu_custom_call.1} parent=1 // pred_check_branch
      %14 = sbr.rel (0) target = $region5
    $region4: #{tpu_custom_call.1} parent=1 // pred_region
      _
    $region5: #{tpu_custom_call.1} parent=1 // pred_fallthru
      _
    // Predicated region
    $region6: #{tpu_custom_call.1} parent=1 // pred_check
      _
    $region7: #{tpu_custom_call.1} parent=1 // pred_check_branch
      %16 = sbr.rel (0) target = $region9
    $region8: #{tpu_custom_call.1} parent=1 // pred_region
      %s18 = ssub.s32 768, 768
      %19 = vsyncadd [#allocation3], %s18
      %s20 = sshll.u32 [#allocation2], 4
      %s21 = int_to_ptr.vmem [resolvable:$true] %s20
      %26 = dma.hbm_to_vmem [thread:$0]  %s1, 768, %s21, [#allocation3], 192, 192, 12
    $region9: #{tpu_custom_call.1} parent=1 // pred_fallthru
      _
    // Predicated region
    $region10: #{tpu_custom_call.1} parent=1 // pred_check
      _
    $region11: #{tpu_custom_call.1} parent=1 // pred_check_branch
      %28 = sbr.rel (0) target = $region13
    $region12: #{tpu_custom_call.1} parent=1 // pred_region
      _
    $region13: #{tpu_custom_call.1} parent=1 // pred_fallthru
      _
    // Predicated region
    $region14: #{tpu_custom_call.1} parent=1 // pred_check
      _
    $region15: #{tpu_custom_call.1} parent=1 // pred_check_branch
      %30 = sbr.rel (0) target = $region17
    $region16: #{tpu_custom_call.1} parent=1 // pred_region
      _
    $region17: #{tpu_custom_call.1} parent=1 // pred_fallthru
      _
    // Predicated region
    $region18: #{tpu_custom_call.1} parent=1 // pred_check
      _
    $region19: #{tpu_custom_call.1} parent=1 // pred_check_branch
      %32 = sbr.rel (0) target = $region21
    $region20: #{tpu_custom_call.1} parent=1 // pred_region
      _
    $region21: #{tpu_custom_call.1} parent=1 // pred_fallthru
      _
    // Predicated region
    $region22: #{tpu_custom_call.1} parent=1 // pred_check
      _
    $region23: #{tpu_custom_call.1} parent=1 // pred_check_branch
      %34 = sbr.rel (0) target = $region25
    $region24: #{tpu_custom_call.1} parent=1 // pred_region
      _
    $region25: #{tpu_custom_call.1} parent=1 // pred_fallthru
      _
    // Predicated region
    $region26: #{tpu_custom_call.1} parent=1 // pred_check
      _
    $region27: #{tpu_custom_call.1} parent=1 // pred_check_branch
      %36 = sbr.rel (0) target = $region29
    $region28: #{tpu_custom_call.1} parent=1 // pred_region
      %37 = dma.done [#allocation3], 768
    $region29: #{tpu_custom_call.1} parent=1 // pred_fallthru
      _
    %v39 = vld [vmem:[%s0] sm:$0xf]
    %v40 = vld [vmem:[%s0 + $0x4] sm:$0xf]
    %v41 = vld [vmem:[%s0 + $0x8] sm:$0xf]
    %v42 = vld [vmem:[%s0 + $0xc] sm:$0xf]
    %v43 = vld [vmem:[%s0 + $0x10] sm:$0xf]
    %v44 = vld [vmem:[%s0 + $0x14] sm:$0xf]
    %v45 = vld [vmem:[%s0 + $0x18] sm:$0xf]
    %v46 = vld [vmem:[%s0 + $0x1c] sm:$0xf]
    %v47 = vld [vmem:[%s0 + $0x20] sm:$0xf]
    %v48 = vld [vmem:[%s0 + $0x24] sm:$0xf]
    %v49 = vld [vmem:[%s0 + $0x28] sm:$0xf]
    %v50 = vld [vmem:[%s0 + $0x2c] sm:$0xf]
    %v51 = vld [vmem:[%s0 + $0x30] sm:$0xf]
    %v52 = vld [vmem:[%s0 + $0x34] sm:$0xf]
    %v53 = vld [vmem:[%s0 + $0x38] sm:$0xf]
    %v54 = vld [vmem:[%s0 + $0x3c] sm:$0xf]
    %v55 = vld [vmem:[#allocation2] sm:$0xff]
    %v56 = vld [vmem:[#allocation2 + $0x8] sm:$0xf]
    %v57 = vld [vmem:[#allocation2 + $0xc] sm:$0xff]
    %v58 = vld [vmem:[#allocation2 + $0x14] sm:$0xf]
    %v59 = vld [vmem:[#allocation2 + $0x18] sm:$0xff]
    %v60 = vld [vmem:[#allocation2 + $0x20] sm:$0xf]
    %v61 = vld [vmem:[#allocation2 + $0x24] sm:$0xff]
    %v62 = vld [vmem:[#allocation2 + $0x2c] sm:$0xf]
    %v79 = vunpack.c.l.b16 %v39
    %v80 = vunpack.c.l.b16 %v40
    %v81 = vunpack.c.l.b16 %v41
    %v82 = vunpack.c.l.b16 %v42
    %v83 = vunpack.c.l.b16 %v43
    %v84 = vunpack.c.l.b16 %v44
    %v85 = vunpack.c.l.b16 %v45
    %v86 = vunpack.c.l.b16 %v46
    %v87 = vunpack.c.l.b16 %v47
    %v88 = vunpack.c.l.b16 %v48
    %v89 = vunpack.c.l.b16 %v49
    %v90 = vunpack.c.l.b16 %v50
    %v91 = vunpack.c.l.b16 %v51
    %v92 = vunpack.c.l.b16 %v52
    %v93 = vunpack.c.l.b16 %v53
    %v94 = vunpack.c.l.b16 %v54
    %v95 = vpack.c.b16 %v80, %v79
    %v96 = vpack.c.b16 %v82, %v81
    %v97 = vpack.c.b16 %v84, %v83
    %v98 = vpack.c.b16 %v86, %v85
    %v99 = vpack.c.b16 %v88, %v87
    %v100 = vpack.c.b16 %v90, %v89
    %v101 = vpack.c.b16 %v92, %v91
    %v102 = vpack.c.b16 %v94, %v93
    %v111 = vunpack.c.l.b16 %v55
    %v112 = vunpack.c.h.b16 %v55
    %v113 = vunpack.c.l.b16 %v56
    %v114 = vunpack.c.l.b16 %v57
    %v115 = vunpack.c.h.b16 %v57
    %v116 = vunpack.c.l.b16 %v58
    %v117 = vunpack.c.l.b16 %v59
    %v118 = vunpack.c.h.b16 %v59
    %v119 = vunpack.c.l.b16 %v60
    %v120 = vunpack.c.l.b16 %v61
    %v121 = vunpack.c.h.b16 %v61
    %v122 = vunpack.c.l.b16 %v62
    %v123 = vpack.c.b16 %v114, %v111
    %v124 = vpack.c.b16 %v115, %v112
    %v125 = vpack.c.b16 %v116, %v113
    %v126 = vpack.c.b16 %v120, %v117
    %v127 = vpack.c.b16 %v121, %v118
    %v128 = vpack.c.b16 %v122, %v119
    %vm135 = vcmask 261120
    %v137 = vsel %vm135, %v95, 0
    %v140 = vsel %vm135, %v96, 0
    %v143 = vsel %vm135, %v97, 0
    %v146 = vsel %vm135, %v98, 0
    %v149 = vsel %vm135, %v99, 0
    %v152 = vsel %vm135, %v100, 0
    %v155 = vsel %vm135, %v101, 0
    %v158 = vsel %vm135, %v102, 0
    %160 = vmatprep.subr.bf16.mxu0 %v124
    %161 = vmatpush1.bf16.msra.mxu0 %v123
    %162 = vmatprep.subr.bf16.mxu0 %v127
    %163 = vmatpush1.bf16.msra.mxu0 %v126
    %164 = vmatprep.subr.bf16.mxu0 0
    %165 = vmatpush1.bf16.msra.mxu0 0
    %166 = vmatprep.subr.bf16.mxu0 0
    %167 = vmatpush1.bf16.msra.mxu0 0
    %168 = vmatprep.subr.bf16.mxu0 0
    %169 = vmatpush1.bf16.msra.mxu0 0
    %170 = vmatprep.subr.bf16.mxu0 0
    %171 = vmatpush1.bf16.msra.mxu0 0
    %172 = vmatprep.subr.bf16.mxu0 0
    %173 = vmatpush1.bf16.msra.mxu0 0
    %174 = vmatprep.subr.bf16.mxu0 0
    %175 = vmatpush1.bf16.msra.mxu0 0
    %176 = vmatprep.subr.bf16.mxu0 0
    %177 = vmatpush1.bf16.msra.mxu0 0
    %178 = vmatprep.subr.bf16.mxu0 0
    %179 = vmatpush1.bf16.msra.mxu0 0
    %180 = vmatprep.subr.bf16.mxu0 0
    %181 = vmatpush1.bf16.msra.mxu0 0
    %182 = vmatprep.subr.bf16.mxu0 0
    %183 = vmatpush1.bf16.msra.mxu0 0
    %184 = vmatprep.subr.bf16.mxu0 0
    %185 = vmatpush1.bf16.msra.mxu0 0
    %186 = vmatprep.subr.bf16.mxu0 0
    %187 = vmatpush1.bf16.msra.mxu0 0
    %188 = vmatprep.subr.bf16.mxu0 0
    %189 = vmatpush1.bf16.msra.mxu0 0
    %190 = vmatprep.subr.bf16.mxu0 0
    %191 = vmatpush1.bf16.msra.mxu0 0
    %192 = vmatprep.mubr.bf16.mxu0 0
    %193 = vmatmul.mubr.bf16.gmra.mrb[0].mxu0 %v137
    %v194 = vpop.f32.mrb[0].mxu0
    %v195 = vadd.f32 0.0, %v194
    %v196 = vpop.f32.mrb[0].mxu0
    %v197 = vadd.f32 0.0, %v196
    %v198 = vpop.f32.mrb[0].mxu0
    %v199 = vadd.f32 0.0, %v198
    %v200 = vpop.f32.mrb[0].mxu0
    %v201 = vadd.f32 0.0, %v200
    %202 = vmatprep.mubr.bf16.mxu0 0
    %203 = vmatmul.mubr.bf16.gmra.mrb[0].mxu0 %v140
    %v204 = vpop.f32.mrb[0].mxu0
    %v205 = vadd.f32 0.0, %v204
    %v206 = vpop.f32.mrb[0].mxu0
    %v207 = vadd.f32 0.0, %v206
    %v208 = vpop.f32.mrb[0].mxu0
    %v209 = vadd.f32 0.0, %v208
    %v210 = vpop.f32.mrb[0].mxu0
    %v211 = vadd.f32 0.0, %v210
    %212 = vmatprep.mubr.bf16.mxu0 0
    %213 = vmatmul.mubr.bf16.gmra.mrb[0].mxu0 %v143
    %v214 = vpop.f32.mrb[0].mxu0
    %v215 = vadd.f32 0.0, %v214
    %v216 = vpop.f32.mrb[0].mxu0
    %v217 = vadd.f32 0.0, %v216
    %v218 = vpop.f32.mrb[0].mxu0
    %v219 = vadd.f32 0.0, %v218
    %v220 = vpop.f32.mrb[0].mxu0
    %v221 = vadd.f32 0.0, %v220
    %222 = vmatprep.mubr.bf16.mxu0 0
    %223 = vmatmul.mubr.bf16.gmra.mrb[0].mxu0 %v146
    %v224 = vpop.f32.mrb[0].mxu0
    %v225 = vadd.f32 0.0, %v224
    %v226 = vpop.f32.mrb[0].mxu0
    %v227 = vadd.f32 0.0, %v226
    %v228 = vpop.f32.mrb[0].mxu0
    %v229 = vadd.f32 0.0, %v228
    %v230 = vpop.f32.mrb[0].mxu0
    %v231 = vadd.f32 0.0, %v230
    %232 = vmatprep.mubr.bf16.mxu0 0
    %233 = vmatmul.mubr.bf16.gmra.mrb[0].mxu0 %v149
    %v234 = vpop.f32.mrb[0].mxu0
    %v235 = vadd.f32 0.0, %v234
    %v236 = vpop.f32.mrb[0].mxu0
    %v237 = vadd.f32 0.0, %v236
    %v238 = vpop.f32.mrb[0].mxu0
    %v239 = vadd.f32 0.0, %v238
    %v240 = vpop.f32.mrb[0].mxu0
    %v241 = vadd.f32 0.0, %v240
    %242 = vmatprep.mubr.bf16.mxu0 0
    %243 = vmatmul.mubr.bf16.gmra.mrb[0].mxu0 %v152
    %v244 = vpop.f32.mrb[0].mxu0
    %v245 = vadd.f32 0.0, %v244
    %v246 = vpop.f32.mrb[0].mxu0
    %v247 = vadd.f32 0.0, %v246
    %v248 = vpop.f32.mrb[0].mxu0
    %v249 = vadd.f32 0.0, %v248
    %v250 = vpop.f32.mrb[0].mxu0
    %v251 = vadd.f32 0.0, %v250
    %252 = vmatprep.mubr.bf16.mxu0 0
    %253 = vmatmul.mubr.bf16.gmra.mrb[0].mxu0 %v155
    %v254 = vpop.f32.mrb[0].mxu0
    %v255 = vadd.f32 0.0, %v254
    %v256 = vpop.f32.mrb[0].mxu0
    %v257 = vadd.f32 0.0, %v256
    %v258 = vpop.f32.mrb[0].mxu0
    %v259 = vadd.f32 0.0, %v258
    %v260 = vpop.f32.mrb[0].mxu0
    %v261 = vadd.f32 0.0, %v260
    %262 = vmatprep.mubr.bf16.mxu0 0
    %263 = vmatmul.mubr.bf16.gmra.mrb[0].mxu0 %v158
    %v264 = vpop.f32.mrb[0].mxu0
    %v265 = vadd.f32 0.0, %v264
    %v266 = vpop.f32.mrb[0].mxu0
    %v267 = vadd.f32 0.0, %v266
    %v268 = vpop.f32.mrb[0].mxu0
    %v269 = vadd.f32 0.0, %v268
    %v270 = vpop.f32.mrb[0].mxu0
    %v271 = vadd.f32 0.0, %v270
    %272 = vdwg.mxu0
    %273 = vmatprep.subr.bf16.mxu0 0
    %274 = vmatpush1.bf16.msra.mxu0 %v125
    %275 = vmatprep.subr.bf16.mxu0 0
    %276 = vmatpush1.bf16.msra.mxu0 %v128
    %277 = vmatprep.subr.bf16.mxu0 0
    %278 = vmatpush1.bf16.msra.mxu0 0
    %279 = vmatprep.subr.bf16.mxu0 0
    %280 = vmatpush1.bf16.msra.mxu0 0
    %281 = vmatprep.subr.bf16.mxu0 0
    %282 = vmatpush1.bf16.msra.mxu0 0
    %283 = vmatprep.subr.bf16.mxu0 0
    %284 = vmatpush1.bf16.msra.mxu0 0
    %285 = vmatprep.subr.bf16.mxu0 0
    %286 = vmatpush1.bf16.msra.mxu0 0
    %287 = vmatprep.subr.bf16.mxu0 0
    %288 = vmatpush1.bf16.msra.mxu0 0
    %289 = vmatprep.subr.bf16.mxu0 0
    %290 = vmatpush1.bf16.msra.mxu0 0
    %291 = vmatprep.subr.bf16.mxu0 0
    %292 = vmatpush1.bf16.msra.mxu0 0
    %293 = vmatprep.subr.bf16.mxu0 0
    %294 = vmatpush1.bf16.msra.mxu0 0
    %295 = vmatprep.subr.bf16.mxu0 0
    %296 = vmatpush1.bf16.msra.mxu0 0
    %297 = vmatprep.subr.bf16.mxu0 0
    %298 = vmatpush1.bf16.msra.mxu0 0
    %299 = vmatprep.subr.bf16.mxu0 0
    %300 = vmatpush1.bf16.msra.mxu0 0
    %301 = vmatprep.subr.bf16.mxu0 0
    %302 = vmatpush1.bf16.msra.mxu0 0
    %303 = vmatprep.subr.bf16.mxu0 0
    %304 = vmatpush1.bf16.msra.mxu0 0
    %305 = vmatprep.mubr.bf16.mxu0 0
    %306 = vmatmul.mubr.bf16.gmra.mrb[0].mxu0 %v137
    %v307 = vpop.f32.mrb[0].mxu0
    %v308 = vadd.f32 0.0, %v307
    %v309 = vpop.f32.mrb[0].mxu0
    %v310 = vpop.f32.mrb[0].mxu0
    %v311 = vadd.f32 0.0, %v310
    %v312 = vpop.f32.mrb[0].mxu0
    %313 = vmatprep.mubr.bf16.mxu0 0
    %314 = vmatmul.mubr.bf16.gmra.mrb[0].mxu0 %v140
    %v315 = vpop.f32.mrb[0].mxu0
    %v316 = vadd.f32 0.0, %v315
    %v317 = vpop.f32.mrb[0].mxu0
    %v318 = vpop.f32.mrb[0].mxu0
    %v319 = vadd.f32 0.0, %v318
    %v320 = vpop.f32.mrb[0].mxu0
    %321 = vmatprep.mubr.bf16.mxu0 0
    %322 = vmatmul.mubr.bf16.gmra.mrb[0].mxu0 %v143
    %v323 = vpop.f32.mrb[0].mxu0
    %v324 = vadd.f32 0.0, %v323
    %v325 = vpop.f32.mrb[0].mxu0
    %v326 = vpop.f32.mrb[0].mxu0
    %v327 = vadd.f32 0.0, %v326
    %v328 = vpop.f32.mrb[0].mxu0
    %329 = vmatprep.mubr.bf16.mxu0 0
    %330 = vmatmul.mubr.bf16.gmra.mrb[0].mxu0 %v146
    %v331 = vpop.f32.mrb[0].mxu0
    %v332 = vadd.f32 0.0, %v331
    %v333 = vpop.f32.mrb[0].mxu0
    %v334 = vpop.f32.mrb[0].mxu0
    %v335 = vadd.f32 0.0, %v334
    %v336 = vpop.f32.mrb[0].mxu0
    %337 = vmatprep.mubr.bf16.mxu0 0
    %338 = vmatmul.mubr.bf16.gmra.mrb[0].mxu0 %v149
    %v339 = vpop.f32.mrb[0].mxu0
    %v340 = vadd.f32 0.0, %v339
    %v341 = vpop.f32.mrb[0].mxu0
    %v342 = vpop.f32.mrb[0].mxu0
    %v343 = vadd.f32 0.0, %v342
    %v344 = vpop.f32.mrb[0].mxu0
    %345 = vmatprep.mubr.bf16.mxu0 0
    %346 = vmatmul.mubr.bf16.gmra.mrb[0].mxu0 %v152
    %v347 = vpop.f32.mrb[0].mxu0
    %v348 = vadd.f32 0.0, %v347
    %v349 = vpop.f32.mrb[0].mxu0
    %v350 = vpop.f32.mrb[0].mxu0
    %v351 = vadd.f32 0.0, %v350
    %v352 = vpop.f32.mrb[0].mxu0
    %353 = vmatprep.mubr.bf16.mxu0 0
    %354 = vmatmul.mubr.bf16.gmra.mrb[0].mxu0 %v155
    %v355 = vpop.f32.mrb[0].mxu0
    %v356 = vadd.f32 0.0, %v355
    %v357 = vpop.f32.mrb[0].mxu0
    %v358 = vpop.f32.mrb[0].mxu0
    %v359 = vadd.f32 0.0, %v358
    %v360 = vpop.f32.mrb[0].mxu0
    %361 = vmatprep.mubr.bf16.mxu0 0
    %362 = vmatmul.mubr.bf16.gmra.mrb[0].mxu0 %v158
    %v363 = vpop.f32.mrb[0].mxu0
    %v364 = vadd.f32 0.0, %v363
    %v365 = vpop.f32.mrb[0].mxu0
    %v366 = vpop.f32.mrb[0].mxu0
    %v367 = vadd.f32 0.0, %v366
    %v368 = vpop.f32.mrb[0].mxu0
    %369 = vdwg.mxu0
    %vm386 = vcmask 1046528
    %v387 = vrot.slane %v197, 1
    %v388 = vrot.slane %v201, 1
    %v389 = vsel %vm386, %v387, %v388
    %v390 = vrot.slane %v207, 1
    %v391 = vsel %vm386, %v388, %v390
    %v392 = vrot.slane %v211, 1
    %v393 = vsel %vm386, %v390, %v392
    %v394 = vrot.slane %v217, 1
    %v395 = vsel %vm386, %v392, %v394
    %v396 = vrot.slane %v221, 1
    %v397 = vsel %vm386, %v394, %v396
    %v398 = vrot.slane %v227, 1
    %v399 = vsel %vm386, %v396, %v398
    %v400 = vrot.slane %v231, 1
    %v401 = vsel %vm386, %v398, %v400
    %v402 = vrot.slane %v237, 1
    %v403 = vsel %vm386, %v400, %v402
    %v404 = vrot.slane %v241, 1
    %v405 = vsel %vm386, %v402, %v404
    %v406 = vrot.slane %v247, 1
    %v407 = vsel %vm386, %v404, %v406
    %v408 = vrot.slane %v251, 1
    %v409 = vsel %vm386, %v406, %v408
    %v410 = vrot.slane %v257, 1
    %v411 = vsel %vm386, %v408, %v410
    %v412 = vrot.slane %v261, 1
    %v413 = vsel %vm386, %v410, %v412
    %v414 = vrot.slane %v267, 1
    %v415 = vsel %vm386, %v412, %v414
    %v416 = vrot.slane %v271, 1
    %v417 = vsel %vm386, %v414, %v416
    %v435 = vsel %vm386, %v416, %v387
    %v436 = vadd.f32 %v195, %v389
    %v437 = vadd.f32 %v199, %v391
    %v438 = vadd.f32 %v205, %v393
    %v439 = vadd.f32 %v209, %v395
    %v440 = vadd.f32 %v215, %v397
    %v441 = vadd.f32 %v219, %v399
    %v442 = vadd.f32 %v225, %v401
    %v443 = vadd.f32 %v229, %v403
    %v444 = vadd.f32 %v235, %v405
    %v445 = vadd.f32 %v239, %v407
    %v446 = vadd.f32 %v245, %v409
    %v447 = vadd.f32 %v249, %v411
    %v448 = vadd.f32 %v255, %v413
    %v449 = vadd.f32 %v259, %v415
    %v450 = vadd.f32 %v265, %v417
    %v451 = vadd.f32 %v269, %v435
    %vm468 = vcmask 1045504
    %v469 = vrot.slane %v308, 2
    %v470 = vrot.slane %v311, 2
    %v471 = vsel %vm468, %v469, %v470
    %v472 = vrot.slane %v316, 2
    %v473 = vsel %vm468, %v470, %v472
    %v474 = vrot.slane %v319, 2
    %v475 = vsel %vm468, %v472, %v474
    %v476 = vrot.slane %v324, 2
    %v477 = vsel %vm468, %v474, %v476
    %v478 = vrot.slane %v327, 2
    %v479 = vsel %vm468, %v476, %v478
    %v480 = vrot.slane %v332, 2
    %v481 = vsel %vm468, %v478, %v480
    %v482 = vrot.slane %v335, 2
    %v483 = vsel %vm468, %v480, %v482
    %v484 = vrot.slane %v340, 2
    %v485 = vsel %vm468, %v482, %v484
    %v486 = vrot.slane %v343, 2
    %v487 = vsel %vm468, %v484, %v486
    %v488 = vrot.slane %v348, 2
    %v489 = vsel %vm468, %v486, %v488
    %v490 = vrot.slane %v351, 2
    %v491 = vsel %vm468, %v488, %v490
    %v492 = vrot.slane %v356, 2
    %v493 = vsel %vm468, %v490, %v492
    %v494 = vrot.slane %v359, 2
    %v495 = vsel %vm468, %v492, %v494
    %v496 = vrot.slane %v364, 2
    %v497 = vsel %vm468, %v494, %v496
    %v498 = vrot.slane %v367, 2
    %v499 = vsel %vm468, %v496, %v498
    %v517 = vsel %vm468, %v498, %v469
    %v518 = vadd.f32 %v436, %v471
    %v519 = vadd.f32 %v437, %v473
    %v520 = vadd.f32 %v438, %v475
    %v521 = vadd.f32 %v439, %v477
    %v522 = vadd.f32 %v440, %v479
    %v523 = vadd.f32 %v441, %v481
    %v524 = vadd.f32 %v442, %v483
    %v525 = vadd.f32 %v443, %v485
    %v526 = vadd.f32 %v444, %v487
    %v527 = vadd.f32 %v445, %v489
    %v528 = vadd.f32 %v446, %v491
    %v529 = vadd.f32 %v447, %v493
    %v530 = vadd.f32 %v448, %v495
    %v531 = vadd.f32 %v449, %v497
    %v532 = vadd.f32 %v450, %v499
    %v533 = vadd.f32 %v451, %v517
    %v534 = vld [vmem:[%s2] sm:$0x1]
    %v536 = vlaneseq
    %v537 = vshrl.u32 %v536, 7
    %v538 = vsub.s32 0, %v537
    %v539 = vrot.slane %v534, %v538
    %v541 = vadd.f32 %v518, %v539
    %v542 = vadd.f32 %v519, %v539
    %v543 = vadd.f32 %v520, %v539
    %v544 = vadd.f32 %v521, %v539
    %v545 = vadd.f32 %v522, %v539
    %v546 = vadd.f32 %v523, %v539
    %v547 = vadd.f32 %v524, %v539
    %v548 = vadd.f32 %v525, %v539
    %v549 = vadd.f32 %v526, %v539
    %v550 = vadd.f32 %v527, %v539
    %v551 = vadd.f32 %v528, %v539
    %v552 = vadd.f32 %v529, %v539
    %v553 = vadd.f32 %v530, %v539
    %v554 = vadd.f32 %v531, %v539
    %v555 = vadd.f32 %v532, %v539
    %v556 = vadd.f32 %v533, %v539
    %v557 = vmax.f32 %v541, 0.0
    %v558 = vmax.f32 %v542, 0.0
    %v559 = vmax.f32 %v543, 0.0
    %v560 = vmax.f32 %v544, 0.0
    %v561 = vmax.f32 %v545, 0.0
    %v562 = vmax.f32 %v546, 0.0
    %v563 = vmax.f32 %v547, 0.0
    %v564 = vmax.f32 %v548, 0.0
    %v565 = vmax.f32 %v549, 0.0
    %v566 = vmax.f32 %v550, 0.0
    %v567 = vmax.f32 %v551, 0.0
    %v568 = vmax.f32 %v552, 0.0
    %v569 = vmax.f32 %v553, 0.0
    %v570 = vmax.f32 %v554, 0.0
    %v571 = vmax.f32 %v555, 0.0
    %v572 = vmax.f32 %v556, 0.0
    %v573 = vld [vmem:[%s3] sm:$0xff]
    %v574 = vld [vmem:[%s3 + $0x8] sm:$0xff]
    %v575 = vmul.f32 %v557, %v573
    %v576 = vmul.f32 %v558, %v574
    %v577 = vmul.f32 %v559, %v573
    %v578 = vmul.f32 %v560, %v574
    %v579 = vmul.f32 %v561, %v573
    %v580 = vmul.f32 %v562, %v574
    %v581 = vmul.f32 %v563, %v573
    %v582 = vmul.f32 %v564, %v574
    %v583 = vmul.f32 %v565, %v573
    %v584 = vmul.f32 %v566, %v574
    %v585 = vmul.f32 %v567, %v573
    %v586 = vmul.f32 %v568, %v574
    %v587 = vmul.f32 %v569, %v573
    %v588 = vmul.f32 %v570, %v574
    %v589 = vmul.f32 %v571, %v573
    %v590 = vmul.f32 %v572, %v574
    %v591 = vmax.f32 %v575, %v576
    %v592 = vrot.slane %v591, 4
    %v593 = vmax.f32 %v591, %v592
    %v594 = vrot.slane %v593, 2
    %v595 = vmax.f32 %v593, %v594
    %v596 = vrot.slane %v595, 1
    %v597 = vmax.f32 %v595, %v596
    %v598 = vmax.f32 %v577, %v578
    %v599 = vrot.slane %v598, 4
    %v600 = vmax.f32 %v598, %v599
    %v601 = vrot.slane %v600, 2
    %v602 = vmax.f32 %v600, %v601
    %v603 = vrot.slane %v602, 1
    %v604 = vmax.f32 %v602, %v603
    %v605 = vmax.f32 %v579, %v580
    %v606 = vrot.slane %v605, 4
    %v607 = vmax.f32 %v605, %v606
    %v608 = vrot.slane %v607, 2
    %v609 = vmax.f32 %v607, %v608
    %v610 = vrot.slane %v609, 1
    %v611 = vmax.f32 %v609, %v610
    %v612 = vmax.f32 %v581, %v582
    %v613 = vrot.slane %v612, 4
    %v614 = vmax.f32 %v612, %v613
    %v615 = vrot.slane %v614, 2
    %v616 = vmax.f32 %v614, %v615
    %v617 = vrot.slane %v616, 1
    %v618 = vmax.f32 %v616, %v617
    %v619 = vmax.f32 %v583, %v584
    %v620 = vrot.slane %v619, 4
    %v621 = vmax.f32 %v619, %v620
    %v622 = vrot.slane %v621, 2
    %v623 = vmax.f32 %v621, %v622
    %v624 = vrot.slane %v623, 1
    %v625 = vmax.f32 %v623, %v624
    %v626 = vmax.f32 %v585, %v586
    %v627 = vrot.slane %v626, 4
    %v628 = vmax.f32 %v626, %v627
    %v629 = vrot.slane %v628, 2
    %v630 = vmax.f32 %v628, %v629
    %v631 = vrot.slane %v630, 1
    %v632 = vmax.f32 %v630, %v631
    %v633 = vmax.f32 %v587, %v588
    %v634 = vrot.slane %v633, 4
    %v635 = vmax.f32 %v633, %v634
    %v636 = vrot.slane %v635, 2
    %v637 = vmax.f32 %v635, %v636
    %v638 = vrot.slane %v637, 1
    %v639 = vmax.f32 %v637, %v638
    %v640 = vmax.f32 %v589, %v590
    %v641 = vrot.slane %v640, 4
    %v642 = vmax.f32 %v640, %v641
    %v643 = vrot.slane %v642, 2
    %v644 = vmax.f32 %v642, %v643
    %v645 = vrot.slane %v644, 1
    %v646 = vmax.f32 %v644, %v645
    %v647 = vpack.c.bf16 %v597, %v597
    %v648 = vpack.c.bf16 %v604, %v604
    %v649 = vpack.c.bf16 %v611, %v611
    %v650 = vpack.c.bf16 %v618, %v618
    %v651 = vpack.c.bf16 %v625, %v625
    %v652 = vpack.c.bf16 %v632, %v632
    %v653 = vpack.c.bf16 %v639, %v639
    %v654 = vpack.c.bf16 %v646, %v646
    %v655 = vld [vmem:[%s4] sm:$0xf]
    %v656 = vld [vmem:[%s4 + $0x4] sm:$0xf]
    %v657 = vld [vmem:[%s4 + $0x8] sm:$0xf]
    %v658 = vld [vmem:[%s4 + $0xc] sm:$0xf]
    %v659 = vld [vmem:[%s4 + $0x10] sm:$0xf]
    %v660 = vld [vmem:[%s4 + $0x14] sm:$0xf]
    %v661 = vld [vmem:[%s4 + $0x18] sm:$0xf]
    %v662 = vld [vmem:[%s4 + $0x1c] sm:$0xf]
    %v663 = vld [vmem:[%s4 + $0x20] sm:$0xf]
    %v664 = vld [vmem:[%s4 + $0x24] sm:$0xf]
    %v665 = vld [vmem:[%s4 + $0x28] sm:$0xf]
    %v666 = vld [vmem:[%s4 + $0x2c] sm:$0xf]
    %v667 = vld [vmem:[%s4 + $0x30] sm:$0xf]
    %v668 = vld [vmem:[%s4 + $0x34] sm:$0xf]
    %v669 = vld [vmem:[%s4 + $0x38] sm:$0xf]
    %v670 = vld [vmem:[%s4 + $0x3c] sm:$0xf]
    %v671 = vld [vmem:[%s5] sm:$0x1]
    %v673 = vlaneseq
    %v674 = vshrl.u32 %v673, 7
    %v675 = vsub.s32 0, %v674
    %v676 = vrot.slane %v671, %v675
    %v686 = vunpack.c.l.b16 %v647
    %v687 = vunpack.c.l.b16 %v648
    %v688 = vunpack.c.l.b16 %v649
    %v689 = vunpack.c.l.b16 %v650
    %v690 = vunpack.c.l.b16 %v651
    %v691 = vunpack.c.l.b16 %v652
    %v692 = vunpack.c.l.b16 %v653
    %v693 = vunpack.c.l.b16 %v654
    %vm694 = vcmask 1041409
    %v695 = vsel %vm694, %v687, %v686
    %vm696 = vcmask 1042434
    %v697 = vsel %vm696, %v688, %v695
    %vm698 = vcmask 1043459
    %v699 = vsel %vm698, %v689, %v697
    %vm700 = vcmask 1044484
    %v701 = vsel %vm700, %v690, %v699
    %vm702 = vcmask 1045509
    %v703 = vsel %vm702, %v691, %v701
    %vm704 = vcmask 1046534
    %v705 = vsel %vm704, %v692, %v703
    %vm706 = vcmask 1047559
    %v707 = vsel %vm706, %v693, %v705
    %v708 = vpack.c.b16 %v707, %v707
    %v726 = vunpack.c.l.b16 %v655
    %v727 = vunpack.c.l.b16 %v656
    %v728 = vunpack.c.l.b16 %v657
    %v729 = vunpack.c.l.b16 %v658
    %v730 = vunpack.c.l.b16 %v659
    %v731 = vunpack.c.l.b16 %v660
    %v732 = vunpack.c.l.b16 %v661
    %v733 = vunpack.c.l.b16 %v662
    %v734 = vunpack.c.l.b16 %v663
    %v735 = vunpack.c.l.b16 %v664
    %v736 = vunpack.c.l.b16 %v665
    %v737 = vunpack.c.l.b16 %v666
    %v738 = vunpack.c.l.b16 %v667
    %v739 = vunpack.c.l.b16 %v668
    %v740 = vunpack.c.l.b16 %v669
    %v741 = vunpack.c.l.b16 %v670
    %v742 = vpack.c.b16 %v727, %v726
    %v743 = vpack.c.b16 %v729, %v728
    %v744 = vpack.c.b16 %v731, %v730
    %v745 = vpack.c.b16 %v733, %v732
    %v746 = vpack.c.b16 %v735, %v734
    %v747 = vpack.c.b16 %v737, %v736
    %v748 = vpack.c.b16 %v739, %v738
    %v749 = vpack.c.b16 %v741, %v740
    %758 = vmatprep.subr.bf16.mxu0 0
    %759 = vmatpush1.bf16.msra.mxu0 %v742
    %760 = vmatprep.subr.bf16.mxu0 0
    %761 = vmatpush1.bf16.msra.mxu0 %v743
    %762 = vmatprep.subr.bf16.mxu0 0
    %763 = vmatpush1.bf16.msra.mxu0 %v744
    %764 = vmatprep.subr.bf16.mxu0 0
    %765 = vmatpush1.bf16.msra.mxu0 %v745
    %766 = vmatprep.subr.bf16.mxu0 0
    %767 = vmatpush1.bf16.msra.mxu0 %v746
    %768 = vmatprep.subr.bf16.mxu0 0
    %769 = vmatpush1.bf16.msra.mxu0 %v747
    %770 = vmatprep.subr.bf16.mxu0 0
    %771 = vmatpush1.bf16.msra.mxu0 %v748
    %772 = vmatprep.subr.bf16.mxu0 0
    %773 = vmatpush1.bf16.msra.mxu0 %v749
    %774 = vmatprep.subr.bf16.mxu0 0
    %775 = vmatpush1.bf16.msra.mxu0 0
    %776 = vmatprep.subr.bf16.mxu0 0
    %777 = vmatpush1.bf16.msra.mxu0 0
    %778 = vmatprep.subr.bf16.mxu0 0
    %779 = vmatpush1.bf16.msra.mxu0 0
    %780 = vmatprep.subr.bf16.mxu0 0
    %781 = vmatpush1.bf16.msra.mxu0 0
    %782 = vmatprep.subr.bf16.mxu0 0
    %783 = vmatpush1.bf16.msra.mxu0 0
    %784 = vmatprep.subr.bf16.mxu0 0
    %785 = vmatpush1.bf16.msra.mxu0 0
    %786 = vmatprep.subr.bf16.mxu0 0
    %787 = vmatpush1.bf16.msra.mxu0 0
    %788 = vmatprep.subr.bf16.mxu0 0
    %789 = vmatpush1.bf16.msra.mxu0 0
    %790 = vmatprep.mubr.bf16.mxu0 0
    %791 = vmatmul.mubr.bf16.gmra.mrb[0].mxu0 %v708
    %v792 = vpop.f32.mrb[0].mxu0
    %v793 = vadd.f32 %v676, %v792
    %v794 = vpop.f32.mrb[0].mxu0
    %v795 = vpop.f32.mrb[0].mxu0
    %v796 = vpop.f32.mrb[0].mxu0
    %797 = vdwg.mxu0
    %v798 = vlaneseq
    %v799 = vand.u32 %v798, 127
    %vm800 = vcmp.lt.s32.totalorder %v799, 4
    %v801 = vsel %vm800, %v793, -1e+30
    %802 = vmax.xlane.f32.xlu0 %v801
    %v803 = vpop.xlane.xlu0 %802
    %v804 = vsub.f32 %v801, %v803
    %v805 = vmul.f32 %v804, 1.442695
    %v806 = vpow.pop %v805
    %807 = vadd.xlane.f32.xlu0 %v806
    %v808 = vpop.xlane.xlu0 %807
    %v809 = vlog2.pop %v808
    %v810 = vmul.f32 %v809, 0.6931472
    %v811 = vadd.f32 %v810, %v803
    %v812 = vsub.f32 %v801, %v811
    %813 = vst [vmem:[#allocation5] sm:$0xff] %v812
    // Predicated region
    $region30: #{tpu_custom_call.1} parent=1 // pred_check
      _
    $region31: #{tpu_custom_call.1} parent=1 // pred_check_branch
      %815 = sbr.rel (0) target = $region33
    $region32: #{tpu_custom_call.1} parent=1 // pred_region
      %s817 = ssub.s32 128, 128
      %818 = vsyncadd [#allocation4], %s817
      %s820 = sshll.u32 [#allocation5], 4
      %s821 = int_to_ptr.vmem [resolvable:$true] %s820
      %823 = dma.vmem_to_hbm [thread:$0]  %s821, 128, %s6, [#allocation4]
    $region33: #{tpu_custom_call.1} parent=1 // pred_fallthru
      _
    // Predicated region
    $region34: #{tpu_custom_call.1} parent=1 // pred_check
      _
    $region35: #{tpu_custom_call.1} parent=1 // pred_check_branch
      %825 = sbr.rel (0) target = $region37
    $region36: #{tpu_custom_call.1} parent=1 // pred_region
      %826 = dma.done [#allocation4], 128
    $region37: #{tpu_custom_call.1} parent=1 // pred_fallthru
      _
    %827 = vsyncpa [#allocation3], 1
    %828 = vsyncpa [#allocation4], 1

</llo_original>
